<compile_context>
chip_gen: v6e
topology: v6e:2x2x1
jax: 0.10.0
libtpu: 0.0.40
codegen_flags: <defaults>
</compile_context>

<pallas_src>
import jax
import jax.numpy as jnp
from jax.experimental import pallas as pl
from jax.experimental.pallas import tpu as pltpu


# ------------------------------- helpers ------------------------------------

def _silu(v):
    # jax.nn.sigmoid routes the transcendental to the EUP and is robust for
    # large-magnitude inputs.
    return v * jax.nn.sigmoid(v)


def _softplus(v):
    # Matches torch.nn.functional.softplus (beta=1, threshold=20).
    return jnp.where(v > 20.0, v, jnp.log1p(jnp.exp(jnp.minimum(v, 20.0))))


# ------------------------------- kernel -------------------------------------

def mamba_block_kernel(
    x_ref,      # (Bt*L, D)    f32  input rows (batch tile folded into M)
    nw_ref,     # (1, D)       f32  RMSNorm weight
    pw_ref,     # (D, 4D)      bf16 [inp_proj.W | D.W]
    pb_ref,     # (1, 4D)      f32  [inp_proj.b | D.b]
    cw_ref,     # (L, 3L)      f32  conv taps [k=0 | k=1 | k=2]
    cb_ref,     # (L, 1)       f32  conv bias
    clw_ref,    # (2D, 2D)     bf16 conv_linear.W
    clb_ref,    # (1, 2D)      f32
    fw_ref,     # (2D, 2D+2N)  bf16 [fc1 | fc2 | fc3]
    fb_ref,     # (1, 2D+2N)   f32
    ow_ref,     # (2D, D)      bf16 out_proj.W
    ob_ref,     # (1, D)       f32
    o_ref,      # (Bt*L, D)    f32
):
    f32 = jnp.float32
    bf16 = jnp.bfloat16

    x = x_ref[...]                                  # (M, D) f32
    M, D = x.shape
    L = cw_ref.shape[0]
    Bt = M // L
    twoD = clw_ref.shape[0]
    N = (fw_ref.shape[1] - twoD) // 2
    eps = 1e-5

    # ---- RMSNorm (f32) ----
    ms = jnp.mean(x * x, axis=-1, keepdims=True)
    xn = x * jax.lax.rsqrt(ms + eps) * nw_ref[...]

    # ---- fused inp_proj + residual-branch (D) projection: one (M,D)@(D,4D) ----
    pd = jnp.dot(xn.astype(bf16), pw_ref[...], preferred_element_type=f32) + pb_ref[...]
    xp = pd[:, :twoD]                               # inp_proj(xn)      (M, 2D)
    xres = _silu(pd[:, twoD:])                      # silu(D(xn))       (M, 2D)

    # ---- Conv1d(seq, seq, k=3, pad=1) over the feature axis, 3 taps fused ----
    # The feature-axis shift is batch independent, so build it once on (M, 2D).
    col = jax.lax.broadcasted_iota(jnp.int32, (M, twoD), 1)
    xp_m1 = jnp.where(col == 0, 0.0, pltpu.roll(xp, shift=1, axis=1))                 # xp[:, j-1]
    xp_p1 = jnp.where(col == twoD - 1, 0.0, pltpu.roll(xp, shift=twoD - 1, axis=1))   # xp[:, j+1]
    cw = cw_ref[...]
    cb = cb_ref[...]
    xc_rows = []
    for b in range(Bt):                             # static unroll over batch tile
        r0, r1 = b * L, (b + 1) * L
        xcat = jnp.concatenate([xp_m1[r0:r1], xp[r0:r1], xp_p1[r0:r1]], axis=0)  # (3L, 2D)
        xc_rows.append(jnp.dot(cw, xcat, preferred_element_type=f32) + cb)       # (L, 2D)
    xc = xc_rows[0] if Bt == 1 else jnp.concatenate(xc_rows, axis=0)             # (M, 2D)

    # ---- SiLU + conv_linear ----
    u = jnp.dot(_silu(xc).astype(bf16), clw_ref[...], preferred_element_type=f32) + clb_ref[...]

    # ---- S6: fused delta/B/C projections in one (M,2D)@(2D,2D+2N) matmul ----
    f = jnp.dot(u.astype(bf16), fw_ref[...], preferred_element_type=f32) + fb_ref[...]
    delta = _softplus(f[:, :twoD])
    Bm = f[:, twoD:twoD + N]
    Cm = f[:, twoD + N:]
    # TODO(synk): dA = exp(delta @ A) is mathematically omitted - it only
    # multiplies the zero-initialized hidden state h (single step, no
    # recurrence), so it can never contribute to the output.
    # y[l,d] = u[l,d] * delta[l,d] * sum_n B[l,n] * C[l,n]
    bc = jnp.sum(Bm * Cm, axis=-1, keepdims=True)   # (M, 1)
    y = u * delta * bc                              # (M, 2D)

    # ---- gating + out_proj ----
    comb = _silu(y) * xres
    o_ref[...] = jnp.dot(comb.astype(bf16), ow_ref[...], preferred_element_type=f32) + ob_ref[...]


# ------------------------------- wrapper ------------------------------------

def _choose_batch_tile(bs, L, target_rows):
    """Largest batch tile Bt (divisor of bs) with Bt*L <= target_rows, preferring
    >= 2 grid steps so v7x's two TensorCores are both used."""
    max_bt = max(1, target_rows // L)
    divisors = [b for b in range(1, bs + 1) if bs % b == 0 and b <= max_bt]
    if not divisors:
        return 1
    multi = [b for b in divisors if bs // b >= 2]
    return max(multi) if multi else max(divisors)


def pack_params(params):
    bf16 = jnp.bfloat16
    return [
        params["norm_w"],                                                               # (1, D)    f32
        jnp.concatenate([params["inp_w"], params["dw"]], axis=1).astype(bf16),          # (D, 4D)   bf16
        jnp.concatenate([params["inp_b"], params["db"]], axis=1),                       # (1, 4D)   f32
        jnp.concatenate([params["cw0"], params["cw1"], params["cw2"]], axis=1),         # (L, 3L)   f32
        params["cb"],                                                                   # (L, 1)    f32
        params["clw"].astype(bf16),                                                     # (2D, 2D)  bf16
        params["clb"],                                                                  # (1, 2D)   f32
        jnp.concatenate([params["f1w"], params["f2w"], params["f3w"]], axis=1).astype(bf16),  # (2D, 2D+2N)
        jnp.concatenate([params["f1b"], params["f2b"], params["f3b"]], axis=1),         # (1, 2D+2N) f32
        params["ow"].astype(bf16),                                                      # (2D, D)   bf16
        params["ob"],                                                                   # (1, D)    f32
    ]


def mamba_block(x, params, *, target_rows=512):
    bs, L, D = x.shape
    weights = pack_params(params)
    Bt = _choose_batch_tile(bs, L, target_rows)
    steps = bs // Bt
    M = Bt * L

    io_spec = pl.BlockSpec((M, D), lambda i: (i, 0))

    def weight_specs(single_buffer):
        specs = []
        for a in weights:
            idx = lambda i, _nd=a.ndim: (0,) * _nd
            if single_buffer:
                # Constant-index weights: a second pipeline buffer is wasted VMEM.
                specs.append(pl.BlockSpec(a.shape, idx, pipeline_mode=pl.Buffered(1)))
            else:
                specs.append(pl.BlockSpec(a.shape, idx))
        return specs

    def build(single_buffer):
        call = pl.pallas_call(
            mamba_block_kernel,
            out_shape=jax.ShapeDtypeStruct((bs * L, D), jnp.float32),
            grid_spec=pl.GridSpec(
                grid=(steps,),
                in_specs=[io_spec] + weight_specs(single_buffer),
                out_specs=io_spec),
            compiler_params=pltpu.CompilerParams(
                dimension_semantics=("parallel",),
                vmem_limit_bytes=64 * 1024 * 1024),
        )

        @jax.jit
        def fwd(x3, *ws):
            x2 = x3.reshape(bs * L, D)              # fold batch into rows (free in XLA)
            return call(x2, *ws).reshape(bs, L, D)

        return fwd

    try:
        out = jax.block_until_ready(build(True)(x, *weights))
    except Exception:
        # pipeline_mode=pl.Buffered(1) not supported on this jax version:
        # fall back to default (double-buffered) weight blocks.
        out = jax.block_until_ready(build(False)(x, *weights))
    return out


# ------------------------------- params -------------------------------------

def init_params(key, seq_len, d_model, state_size):
    twoD = 2 * d_model
    ks = jax.random.split(key, 18)
    r = lambda k, shape: (0.1 * jax.random.normal(k, shape)).astype(jnp.float32)
    params = {
        "norm_w": jnp.ones((1, d_model), jnp.float32),
        # Linear weights stored pre-transposed: (in, out)
        "inp_w": r(ks[0], (d_model, twoD)), "inp_b": r(ks[1], (1, twoD)),
        # Conv1d(seq, seq, k=3) split into per-tap (L_out, L_in) matrices
        "cw0": r(ks[2], (seq_len, seq_len)),
        "cw1": r(ks[3], (seq_len, seq_len)),
        "cw2": r(ks[4], (seq_len, seq_len)),
        "cb": r(ks[5], (seq_len, 1)),
        "clw": r(ks[6], (twoD, twoD)), "clb": r(ks[7], (1, twoD)),
        "f1w": r(ks[8], (twoD, twoD)), "f1b": r(ks[9], (1, twoD)),
        "f2w": r(ks[10], (twoD, state_size)), "f2b": r(ks[11], (1, state_size)),
        "f3w": r(ks[12], (twoD, state_size)), "f3b": r(ks[13], (1, state_size)),
        "dw": r(ks[14], (d_model, twoD)), "db": r(ks[15], (1, twoD)),
        "ow": r(ks[16], (twoD, d_model)),
        "ob": jnp.ones((1, d_model), jnp.float32),   # nn.init.constant_(out_proj.bias, 1.0)
    }
    # A parameter of S6 (cannot affect the output: h is initialized to zero).
    A = r(ks[17], (twoD, state_size))
    return params, A


# ------------------------------- reference ----------------------------------

def ref_forward(x, p, A):
    """Pure-JAX reference, faithful to the PyTorch module.  Linear layers use
    bf16 operands with f32 accumulation to mirror the kernel's MXU math."""
    bf16, f32 = jnp.bfloat16, jnp.float32

    def lin(a, w, b):
        return jnp.einsum("blc,cd->bld", a.astype(bf16), w.astype(bf16),
                          preferred_element_type=f32) + b[0]

    eps = 1e-5
    xn = x * jax.lax.rsqrt(jnp.mean(x * x, -1, keepdims=True) + eps) * p["norm_w"][0]
    xp = lin(xn, p["inp_w"], p["inp_b"])
    twoD = xp.shape[-1]
    xpad = jnp.pad(xp, ((0, 0), (0, 0), (1, 1)))     # Conv1d padding=1 on the feature axis
    xc = (jnp.einsum("ic,bcj->bij", p["cw0"], xpad[:, :, 0:twoD])
          + jnp.einsum("ic,bcj->bij", p["cw1"], xpad[:, :, 1:twoD + 1])
          + jnp.einsum("ic,bcj->bij", p["cw2"], xpad[:, :, 2:twoD + 2])
          + p["cb"][None, :, :])
    u = lin(_silu(xc), p["clw"], p["clb"])
    Bm = lin(u, p["f2w"], p["f2b"])
    Cm = lin(u, p["f3w"], p["f3b"])
    delta = _softplus(lin(u, p["f1w"], p["f1b"]))
    dB = delta[..., None] * Bm[:, :, None, :]
    dA = jnp.exp(jnp.einsum("bld,dn->bldn", delta, A))
    h = dA * jnp.zeros_like(dA) + u[..., None] * dB   # h starts at zero (single step)
    y = jnp.einsum("bln,bldn->bld", Cm, h)
    xres = _silu(lin(xn, p["dw"], p["db"]))
    return lin(_silu(y) * xres, p["ow"], p["ob"])


# --------------------------------- main -------------------------------------

if __name__ == "__main__":
    bs, seq_len, d_model, state_size = 4, 8, 32, 16
    key = jax.random.PRNGKey(0)
    kx, kp = jax.random.split(key)
    x = jax.random.normal(kx, (bs, seq_len, d_model), dtype=jnp.float32)
    params, A = init_params(kp, seq_len, d_model, state_size)

    out = jax.block_until_ready(mamba_block(x, params))
    ref = jax.block_until_ready(ref_forward(x, params, A))

    assert out.shape == (bs, seq_len, d_model)
    max_err = float(jnp.max(jnp.abs(out - ref)))
    assert jnp.allclose(out, ref, atol=1e-2, rtol=1e-2), max_err
    print("KERNEL_OK")
</pallas_src>

<mosaic_0001>
module attributes {stable_mosaic.version = 11 : i64} {
  func.func @mamba_block_kernel(%arg0: i32, %arg1: memref<16x32xf32, #tpu.memory_space<vmem>>, %arg2: memref<1x32xf32, #tpu.memory_space<vmem>>, %arg3: memref<32x128xbf16, #tpu.memory_space<vmem>>, %arg4: memref<1x128xf32, #tpu.memory_space<vmem>>, %arg5: memref<8x24xf32, #tpu.memory_space<vmem>>, %arg6: memref<8x1xf32, #tpu.memory_space<vmem>>, %arg7: memref<64x64xbf16, #tpu.memory_space<vmem>>, %arg8: memref<1x64xf32, #tpu.memory_space<vmem>>, %arg9: memref<64x96xbf16, #tpu.memory_space<vmem>>, %arg10: memref<1x96xf32, #tpu.memory_space<vmem>>, %arg11: memref<64x32xbf16, #tpu.memory_space<vmem>>, %arg12: memref<1x32xf32, #tpu.memory_space<vmem>>, %arg13: memref<16x32xf32, #tpu.memory_space<vmem>>) attributes {dimension_semantics = [#tpu.dimension_semantics<parallel>], iteration_bounds = array<i64: 2>, scalar_prefetch = 0 : i64, scratch_operands = 0 : i64, tpu.core_type = #tpu.core_type<tc>, window_params = [{transform_indices = @transform_0, window_bounds = array<i64: 16, 32>}, {pipeline_mode = #tpu.pipeline_mode<synchronous>, transform_indices = @transform_1, window_bounds = array<i64: 1, 32>}, {pipeline_mode = #tpu.pipeline_mode<synchronous>, transform_indices = @transform_2, window_bounds = array<i64: 32, 128>}, {pipeline_mode = #tpu.pipeline_mode<synchronous>, transform_indices = @transform_3, window_bounds = array<i64: 1, 128>}, {pipeline_mode = #tpu.pipeline_mode<synchronous>, transform_indices = @transform_4, window_bounds = array<i64: 8, 24>}, {pipeline_mode = #tpu.pipeline_mode<synchronous>, transform_indices = @transform_5, window_bounds = array<i64: 8, 1>}, {pipeline_mode = #tpu.pipeline_mode<synchronous>, transform_indices = @transform_6, window_bounds = array<i64: 64, 64>}, {pipeline_mode = #tpu.pipeline_mode<synchronous>, transform_indices = @transform_7, window_bounds = array<i64: 1, 64>}, {pipeline_mode = #tpu.pipeline_mode<synchronous>, transform_indices = @transform_8, window_bounds = array<i64: 64, 96>}, {pipeline_mode = #tpu.pipeline_mode<synchronous>, transform_indices = @transform_9, window_bounds = array<i64: 1, 96>}, {pipeline_mode = #tpu.pipeline_mode<synchronous>, transform_indices = @transform_10, window_bounds = array<i64: 64, 32>}, {pipeline_mode = #tpu.pipeline_mode<synchronous>, transform_indices = @transform_11, window_bounds = array<i64: 1, 32>}, {transform_indices = @transform_12, window_bounds = array<i64: 16, 32>}]} {
    %c0 = arith.constant 0 : index
    %c0_0 = arith.constant 0 : index
    %0 = vector.load %arg1[%c0, %c0_0] : memref<16x32xf32, #tpu.memory_space<vmem>>, vector<16x32xf32>
    %1 = arith.mulf %0, %0 : vector<16x32xf32>
    %cst = arith.constant dense<0.000000e+00> : vector<16xf32>
    %2 = vector.multi_reduction <add>, %1, %cst [1] : vector<16x32xf32> to vector<16xf32>
    %3 = vector.shape_cast %2 : vector<16xf32> to vector<16x1xf32>
    %cst_1 = arith.constant 3.200000e+01 : f32
    %4 = vector.broadcast %cst_1 : f32 to vector<16x1xf32>
    %5 = arith.divf %3, %4 : vector<16x1xf32>
    %cst_2 = arith.constant 9.99999974E-6 : f32
    %6 = vector.broadcast %cst_2 : f32 to vector<16x1xf32>
    %7 = arith.addf %5, %6 : vector<16x1xf32>
    %8 = math.rsqrt %7 : vector<16x1xf32>
    %9 = vector.broadcast %8 : vector<16x1xf32> to vector<16x32xf32>
    %10 = arith.mulf %0, %9 : vector<16x32xf32>
    %c0_3 = arith.constant 0 : index
    %c0_4 = arith.constant 0 : index
    %11 = vector.load %arg2[%c0_3, %c0_4] : memref<1x32xf32, #tpu.memory_space<vmem>>, vector<1x32xf32>
    %12 = vector.broadcast %11 : vector<1x32xf32> to vector<16x32xf32>
    %13 = arith.mulf %10, %12 : vector<16x32xf32>
    %14 = arith.truncf %13 : vector<16x32xf32> to vector<16x32xbf16>
    %c0_5 = arith.constant 0 : index
    %c0_6 = arith.constant 0 : index
    %15 = vector.load %arg3[%c0_5, %c0_6] : memref<32x128xbf16, #tpu.memory_space<vmem>>, vector<32x128xbf16>
    %cst_7 = arith.constant dense<0.000000e+00> : vector<16x128xf32>
    %16 = tpu.matmul %14, %15, %cst_7 {dimension_numbers = #tpu.dot_dimension_numbers<[1], [0], [0], [1], [0, 0, 1, 1], [], []>} : vector<16x32xbf16>, vector<32x128xbf16>, vector<16x128xf32> -> vector<16x128xf32>
    %c0_8 = arith.constant 0 : index
    %c0_9 = arith.constant 0 : index
    %17 = vector.load %arg4[%c0_8, %c0_9] : memref<1x128xf32, #tpu.memory_space<vmem>>, vector<1x128xf32>
    %18 = vector.broadcast %17 : vector<1x128xf32> to vector<16x128xf32>
    %19 = arith.addf %16, %18 : vector<16x128xf32>
    %20 = vector.extract_strided_slice %19 {offsets = [0, 0], sizes = [16, 64], strides = [1, 1]} : vector<16x128xf32> to vector<16x64xf32>
    %21 = vector.extract_strided_slice %19 {offsets = [0, 64], sizes = [16, 64], strides = [1, 1]} : vector<16x128xf32> to vector<16x64xf32>
    %22 = arith.negf %21 : vector<16x64xf32>
    %23 = math.exp %22 : vector<16x64xf32>
    %cst_10 = arith.constant 1.000000e+00 : f32
    %24 = vector.broadcast %cst_10 : f32 to vector<16x64xf32>
    %25 = arith.addf %24, %23 : vector<16x64xf32>
    %26 = arith.divf %24, %25 : vector<16x64xf32>
    %27 = arith.mulf %21, %26 : vector<16x64xf32>
    %28 = tpu.iota {dimensions = array<i32: 1>} : vector<16x64xi32>
    %c0_i32 = arith.constant 0 : i32
    %29 = vector.broadcast %c0_i32 : i32 to vector<16x64xi32>
    %30 = arith.cmpi eq, %28, %29 : vector<16x64xi32>
    %c1_i32 = arith.constant 1 : i32
    %31 = tpu.dynamic_rotate %20 by %c1_i32 dim 1 : vector<16x64xf32>, i32 -> vector<16x64xf32>
    %cst_11 = arith.constant 0.000000e+00 : f32
    %32 = vector.broadcast %cst_11 : f32 to vector<16x64xf32>
    %33 = arith.select %30, %32, %31 : vector<16x64xi1>, vector<16x64xf32>
    %c63_i32 = arith.constant 63 : i32
    %34 = vector.broadcast %c63_i32 : i32 to vector<16x64xi32>
    %35 = arith.cmpi eq, %28, %34 : vector<16x64xi32>
    %c63_i32_12 = arith.constant 63 : i32
    %36 = tpu.dynamic_rotate %20 by %c63_i32_12 dim 1 : vector<16x64xf32>, i32 -> vector<16x64xf32>
    %cst_13 = arith.constant 0.000000e+00 : f32
    %37 = vector.broadcast %cst_13 : f32 to vector<16x64xf32>
    %38 = arith.select %35, %37, %36 : vector<16x64xi1>, vector<16x64xf32>
    %c0_14 = arith.constant 0 : index
    %c0_15 = arith.constant 0 : index
    %39 = vector.load %arg5[%c0_14, %c0_15] : memref<8x24xf32, #tpu.memory_space<vmem>>, vector<8x24xf32>
    %c0_16 = arith.constant 0 : index
    %c0_17 = arith.constant 0 : index
    %40 = vector.load %arg6[%c0_16, %c0_17] : memref<8x1xf32, #tpu.memory_space<vmem>>, vector<8x1xf32>
    %41 = vector.extract_strided_slice %33 {offsets = [0, 0], sizes = [8, 64], strides = [1, 1]} : vector<16x64xf32> to vector<8x64xf32>
    %42 = vector.extract_strided_slice %20 {offsets = [0, 0], sizes = [8, 64], strides = [1, 1]} : vector<16x64xf32> to vector<8x64xf32>
    %43 = vector.extract_strided_slice %38 {offsets = [0, 0], sizes = [8, 64], strides = [1, 1]} : vector<16x64xf32> to vector<8x64xf32>
    %44 = tpu.concatenate %41, %42, %43 in 0 : vector<8x64xf32>, vector<8x64xf32>, vector<8x64xf32> -> vector<24x64xf32>
    %cst_18 = arith.constant dense<0.000000e+00> : vector<8x64xf32>
    %45 = tpu.matmul %39, %44, %cst_18 {dimension_numbers = #tpu.dot_dimension_numbers<[1], [0], [0], [1], [0, 0, 1, 1], [], []>} : vector<8x24xf32>, vector<24x64xf32>, vector<8x64xf32> -> vector<8x64xf32>
    %46 = vector.broadcast %40 : vector<8x1xf32> to vector<8x64xf32>
    %47 = arith.addf %45, %46 : vector<8x64xf32>
    %48 = vector.extract_strided_slice %33 {offsets = [8, 0], sizes = [8, 64], strides = [1, 1]} : vector<16x64xf32> to vector<8x64xf32>
    %49 = vector.extract_strided_slice %20 {offsets = [8, 0], sizes = [8, 64], strides = [1, 1]} : vector<16x64xf32> to vector<8x64xf32>
    %50 = vector.extract_strided_slice %38 {offsets = [8, 0], sizes = [8, 64], strides = [1, 1]} : vector<16x64xf32> to vector<8x64xf32>
    %51 = tpu.concatenate %48, %49, %50 in 0 : vector<8x64xf32>, vector<8x64xf32>, vector<8x64xf32> -> vector<24x64xf32>
    %cst_19 = arith.constant dense<0.000000e+00> : vector<8x64xf32>
    %52 = tpu.matmul %39, %51, %cst_19 {dimension_numbers = #tpu.dot_dimension_numbers<[1], [0], [0], [1], [0, 0, 1, 1], [], []>} : vector<8x24xf32>, vector<24x64xf32>, vector<8x64xf32> -> vector<8x64xf32>
    %53 = vector.broadcast %40 : vector<8x1xf32> to vector<8x64xf32>
    %54 = arith.addf %52, %53 : vector<8x64xf32>
    %55 = tpu.concatenate %47, %54 in 0 : vector<8x64xf32>, vector<8x64xf32> -> vector<16x64xf32>
    %56 = arith.negf %55 : vector<16x64xf32>
    %57 = math.exp %56 : vector<16x64xf32>
    %cst_20 = arith.constant 1.000000e+00 : f32
    %58 = vector.broadcast %cst_20 : f32 to vector<16x64xf32>
    %59 = arith.addf %58, %57 : vector<16x64xf32>
    %60 = arith.divf %58, %59 : vector<16x64xf32>
    %61 = arith.mulf %55, %60 : vector<16x64xf32>
    %62 = arith.truncf %61 : vector<16x64xf32> to vector<16x64xbf16>
    %c0_21 = arith.constant 0 : index
    %c0_22 = arith.constant 0 : index
    %63 = vector.load %arg7[%c0_21, %c0_22] : memref<64x64xbf16, #tpu.memory_space<vmem>>, vector<64x64xbf16>
    %cst_23 = arith.constant dense<0.000000e+00> : vector<16x64xf32>
    %64 = tpu.matmul %62, %63, %cst_23 {dimension_numbers = #tpu.dot_dimension_numbers<[1], [0], [0], [1], [0, 0, 1, 1], [], []>} : vector<16x64xbf16>, vector<64x64xbf16>, vector<16x64xf32> -> vector<16x64xf32>
    %c0_24 = arith.constant 0 : index
    %c0_25 = arith.constant 0 : index
    %65 = vector.load %arg8[%c0_24, %c0_25] : memref<1x64xf32, #tpu.memory_space<vmem>>, vector<1x64xf32>
    %66 = vector.broadcast %65 : vector<1x64xf32> to vector<16x64xf32>
    %67 = arith.addf %64, %66 : vector<16x64xf32>
    %68 = arith.truncf %67 : vector<16x64xf32> to vector<16x64xbf16>
    %c0_26 = arith.constant 0 : index
    %c0_27 = arith.constant 0 : index
    %69 = vector.load %arg9[%c0_26, %c0_27] : memref<64x96xbf16, #tpu.memory_space<vmem>>, vector<64x96xbf16>
    %cst_28 = arith.constant dense<0.000000e+00> : vector<16x96xf32>
    %70 = tpu.matmul %68, %69, %cst_28 {dimension_numbers = #tpu.dot_dimension_numbers<[1], [0], [0], [1], [0, 0, 1, 1], [], []>} : vector<16x64xbf16>, vector<64x96xbf16>, vector<16x96xf32> -> vector<16x96xf32>
    %c0_29 = arith.constant 0 : index
    %c0_30 = arith.constant 0 : index
    %71 = vector.load %arg10[%c0_29, %c0_30] : memref<1x96xf32, #tpu.memory_space<vmem>>, vector<1x96xf32>
    %72 = vector.broadcast %71 : vector<1x96xf32> to vector<16x96xf32>
    %73 = arith.addf %70, %72 : vector<16x96xf32>
    %74 = vector.extract_strided_slice %73 {offsets = [0, 0], sizes = [16, 64], strides = [1, 1]} : vector<16x96xf32> to vector<16x64xf32>
    %cst_31 = arith.constant 2.000000e+01 : f32
    %75 = vector.broadcast %cst_31 : f32 to vector<16x64xf32>
    %76 = arith.cmpf ogt, %74, %75 : vector<16x64xf32>
    %cst_32 = arith.constant 2.000000e+01 : f32
    %77 = vector.broadcast %cst_32 : f32 to vector<16x64xf32>
    %78 = arith.minimumf %74, %77 : vector<16x64xf32>
    %79 = math.exp %78 : vector<16x64xf32>
    %80 = math.log1p %79 : vector<16x64xf32>
    %81 = arith.select %76, %74, %80 : vector<16x64xi1>, vector<16x64xf32>
    %82 = vector.extract_strided_slice %73 {offsets = [0, 64], sizes = [16, 16], strides = [1, 1]} : vector<16x96xf32> to vector<16x16xf32>
    %83 = vector.extract_strided_slice %73 {offsets = [0, 80], sizes = [16, 16], strides = [1, 1]} : vector<16x96xf32> to vector<16x16xf32>
    %84 = arith.mulf %82, %83 : vector<16x16xf32>
    %cst_33 = arith.constant dense<0.000000e+00> : vector<16xf32>
    %85 = vector.multi_reduction <add>, %84, %cst_33 [1] : vector<16x16xf32> to vector<16xf32>
    %86 = vector.shape_cast %85 : vector<16xf32> to vector<16x1xf32>
    %87 = arith.mulf %67, %81 : vector<16x64xf32>
    %88 = vector.broadcast %86 : vector<16x1xf32> to vector<16x64xf32>
    %89 = arith.mulf %87, %88 : vector<16x64xf32>
    %90 = arith.negf %89 : vector<16x64xf32>
    %91 = math.exp %90 : vector<16x64xf32>
    %cst_34 = arith.constant 1.000000e+00 : f32
    %92 = vector.broadcast %cst_34 : f32 to vector<16x64xf32>
    %93 = arith.addf %92, %91 : vector<16x64xf32>
    %94 = arith.divf %92, %93 : vector<16x64xf32>
    %95 = arith.mulf %89, %94 : vector<16x64xf32>
    %96 = arith.mulf %95, %27 : vector<16x64xf32>
    %97 = arith.truncf %96 : vector<16x64xf32> to vector<16x64xbf16>
    %c0_35 = arith.constant 0 : index
    %c0_36 = arith.constant 0 : index
    %98 = vector.load %arg11[%c0_35, %c0_36] : memref<64x32xbf16, #tpu.memory_space<vmem>>, vector<64x32xbf16>
    %cst_37 = arith.constant dense<0.000000e+00> : vector<16x32xf32>
    %99 = tpu.matmul %97, %98, %cst_37 {dimension_numbers = #tpu.dot_dimension_numbers<[1], [0], [0], [1], [0, 0, 1, 1], [], []>} : vector<16x64xbf16>, vector<64x32xbf16>, vector<16x32xf32> -> vector<16x32xf32>
    %c0_38 = arith.constant 0 : index
    %c0_39 = arith.constant 0 : index
    %100 = vector.load %arg12[%c0_38, %c0_39] : memref<1x32xf32, #tpu.memory_space<vmem>>, vector<1x32xf32>
    %101 = vector.broadcast %100 : vector<1x32xf32> to vector<16x32xf32>
    %102 = arith.addf %99, %101 : vector<16x32xf32>
    %c0_40 = arith.constant 0 : index
    %c0_41 = arith.constant 0 : index
    %103 = vector.load %arg13[%c0_40, %c0_41] : memref<16x32xf32, #tpu.memory_space<vmem>>, vector<16x32xf32>
    tpu.vector_store %arg13[%c0_40, %c0_41], %102 {strides = array<i32>} : memref<16x32xf32, #tpu.memory_space<vmem>>, vector<16x32xf32>,
    return
  }
  func.func @transform_0(%arg0: i32) -> (i32, i32) {
    %c0_i32 = arith.constant 0 : i32
    %c0_i32_0 = arith.constant 0 : i32
    return %arg0, %c0_i32 : i32, i32
  }
  func.func @transform_1(%arg0: i32) -> (i32, i32) {
    %c0_i32 = arith.constant 0 : i32
    %c0_i32_0 = arith.constant 0 : i32
    %c0_i32_1 = arith.constant 0 : i32
    return %c0_i32, %c0_i32_0 : i32, i32
  }
  func.func @transform_2(%arg0: i32) -> (i32, i32) {
    %c0_i32 = arith.constant 0 : i32
    %c0_i32_0 = arith.constant 0 : i32
    %c0_i32_1 = arith.constant 0 : i32
    return %c0_i32, %c0_i32_0 : i32, i32
  }
  func.func @transform_3(%arg0: i32) -> (i32, i32) {
    %c0_i32 = arith.constant 0 : i32
    %c0_i32_0 = arith.constant 0 : i32
    %c0_i32_1 = arith.constant 0 : i32
    return %c0_i32, %c0_i32_0 : i32, i32
  }
  func.func @transform_4(%arg0: i32) -> (i32, i32) {
    %c0_i32 = arith.constant 0 : i32
    %c0_i32_0 = arith.constant 0 : i32
    %c0_i32_1 = arith.constant 0 : i32
    return %c0_i32, %c0_i32_0 : i32, i32
  }
  func.func @transform_5(%arg0: i32) -> (i32, i32) {
    %c0_i32 = arith.constant 0 : i32
    %c0_i32_0 = arith.constant 0 : i32
    %c0_i32_1 = arith.constant 0 : i32
    return %c0_i32, %c0_i32_0 : i32, i32
  }
  func.func @transform_6(%arg0: i32) -> (i32, i32) {
    %c0_i32 = arith.constant 0 : i32
    %c0_i32_0 = arith.constant 0 : i32
    %c0_i32_1 = arith.constant 0 : i32
    return %c0_i32, %c0_i32_0 : i32, i32
  }
  func.func @transform_7(%arg0: i32) -> (i32, i32) {
    %c0_i32 = arith.constant 0 : i32
    %c0_i32_0 = arith.constant 0 : i32
    %c0_i32_1 = arith.constant 0 : i32
    return %c0_i32, %c0_i32_0 : i32, i32
  }
  func.func @transform_8(%arg0: i32) -> (i32, i32) {
    %c0_i32 = arith.constant 0 : i32
    %c0_i32_0 = arith.constant 0 : i32
    %c0_i32_1 = arith.constant 0 : i32
    return %c0_i32, %c0_i32_0 : i32, i32
  }
  func.func @transform_9(%arg0: i32) -> (i32, i32) {
    %c0_i32 = arith.constant 0 : i32
    %c0_i32_0 = arith.constant 0 : i32
    %c0_i32_1 = arith.constant 0 : i32
    return %c0_i32, %c0_i32_0 : i32, i32
  }
  func.func @transform_10(%arg0: i32) -> (i32, i32) {
    %c0_i32 = arith.constant 0 : i32
    %c0_i32_0 = arith.constant 0 : i32
    %c0_i32_1 = arith.constant 0 : i32
    return %c0_i32, %c0_i32_0 : i32, i32
  }
  func.func @transform_11(%arg0: i32) -> (i32, i32) {
    %c0_i32 = arith.constant 0 : i32
    %c0_i32_0 = arith.constant 0 : i32
    %c0_i32_1 = arith.constant 0 : i32
    return %c0_i32, %c0_i32_0 : i32, i32
  }
  func.func @transform_12(%arg0: i32) -> (i32, i32) {
    %c0_i32 = arith.constant 0 : i32
    %c0_i32_0 = arith.constant 0 : i32
    return %arg0, %c0_i32 : i32, i32
  }
}

module attributes {stable_mosaic.version = 11 : i64} {
  func.func @mamba_block_kernel(%arg0: i32, %arg1: memref<16x32xf32, #tpu.memory_space<vmem>>, %arg2: memref<1x32xf32, #tpu.memory_space<vmem>>, %arg3: memref<32x128xbf16, #tpu.memory_space<vmem>>, %arg4: memref<1x128xf32, #tpu.memory_space<vmem>>, %arg5: memref<8x24xf32, #tpu.memory_space<vmem>>, %arg6: memref<8x1xf32, #tpu.memory_space<vmem>>, %arg7: memref<64x64xbf16, #tpu.memory_space<vmem>>, %arg8: memref<1x64xf32, #tpu.memory_space<vmem>>, %arg9: memref<64x96xbf16, #tpu.memory_space<vmem>>, %arg10: memref<1x96xf32, #tpu.memory_space<vmem>>, %arg11: memref<64x32xbf16, #tpu.memory_space<vmem>>, %arg12: memref<1x32xf32, #tpu.memory_space<vmem>>, %arg13: memref<16x32xf32, #tpu.memory_space<vmem>>) attributes {dimension_semantics = [#tpu.dimension_semantics<parallel>], iteration_bounds = array<i64: 2>, scalar_prefetch = 0 : i64, scratch_operands = 0 : i64, tpu.core_type = #tpu.core_type<tc>, window_params = [{transform_indices = @transform_0, window_bounds = array<i64: 16, 32>}, {pipeline_mode = #tpu.pipeline_mode<synchronous>, transform_indices = @transform_1, window_bounds = array<i64: 1, 32>}, {pipeline_mode = #tpu.pipeline_mode<synchronous>, transform_indices = @transform_2, window_bounds = array<i64: 32, 128>}, {pipeline_mode = #tpu.pipeline_mode<synchronous>, transform_indices = @transform_3, window_bounds = array<i64: 1, 128>}, {pipeline_mode = #tpu.pipeline_mode<synchronous>, transform_indices = @transform_4, window_bounds = array<i64: 8, 24>}, {pipeline_mode = #tpu.pipeline_mode<synchronous>, transform_indices = @transform_5, window_bounds = array<i64: 8, 1>}, {pipeline_mode = #tpu.pipeline_mode<synchronous>, transform_indices = @transform_6, window_bounds = array<i64: 64, 64>}, {pipeline_mode = #tpu.pipeline_mode<synchronous>, transform_indices = @transform_7, window_bounds = array<i64: 1, 64>}, {pipeline_mode = #tpu.pipeline_mode<synchronous>, transform_indices = @transform_8, window_bounds = array<i64: 64, 96>}, {pipeline_mode = #tpu.pipeline_mode<synchronous>, transform_indices = @transform_9, window_bounds = array<i64: 1, 96>}, {pipeline_mode = #tpu.pipeline_mode<synchronous>, transform_indices = @transform_10, window_bounds = array<i64: 64, 32>}, {pipeline_mode = #tpu.pipeline_mode<synchronous>, transform_indices = @transform_11, window_bounds = array<i64: 1, 32>}, {transform_indices = @transform_12, window_bounds = array<i64: 16, 32>}]} {
    %c0 = arith.constant 0 : index
    %c0_0 = arith.constant 0 : index
    %0 = vector.load %arg1[%c0, %c0_0] : memref<16x32xf32, #tpu.memory_space<vmem>>, vector<16x32xf32>
    %1 = arith.mulf %0, %0 : vector<16x32xf32>
    %cst = arith.constant dense<0.000000e+00> : vector<16xf32>
    %2 = vector.multi_reduction <add>, %1, %cst [1] : vector<16x32xf32> to vector<16xf32>
    %3 = vector.shape_cast %2 : vector<16xf32> to vector<16x1xf32>
    %cst_1 = arith.constant 3.200000e+01 : f32
    %4 = vector.broadcast %cst_1 : f32 to vector<16x1xf32>
    %5 = arith.divf %3, %4 : vector<16x1xf32>
    %cst_2 = arith.constant 9.99999974E-6 : f32
    %6 = vector.broadcast %cst_2 : f32 to vector<16x1xf32>
    %7 = arith.addf %5, %6 : vector<16x1xf32>
    %8 = math.rsqrt %7 : vector<16x1xf32>
    %9 = vector.broadcast %8 : vector<16x1xf32> to vector<16x32xf32>
    %10 = arith.mulf %0, %9 : vector<16x32xf32>
    %c0_3 = arith.constant 0 : index
    %c0_4 = arith.constant 0 : index
    %11 = vector.load %arg2[%c0_3, %c0_4] : memref<1x32xf32, #tpu.memory_space<vmem>>, vector<1x32xf32>
    %12 = vector.broadcast %11 : vector<1x32xf32> to vector<16x32xf32>
    %13 = arith.mulf %10, %12 : vector<16x32xf32>
    %14 = arith.truncf %13 : vector<16x32xf32> to vector<16x32xbf16>
    %c0_5 = arith.constant 0 : index
    %c0_6 = arith.constant 0 : index
    %15 = vector.load %arg3[%c0_5, %c0_6] : memref<32x128xbf16, #tpu.memory_space<vmem>>, vector<32x128xbf16>
    %cst_7 = arith.constant dense<0.000000e+00> : vector<16x128xf32>
    %16 = tpu.matmul %14, %15, %cst_7 {dimension_numbers = #tpu.dot_dimension_numbers<[1], [0], [0], [1], [0, 0, 1, 1], [], []>} : vector<16x32xbf16>, vector<32x128xbf16>, vector<16x128xf32> -> vector<16x128xf32>
    %c0_8 = arith.constant 0 : index
    %c0_9 = arith.constant 0 : index
    %17 = vector.load %arg4[%c0_8, %c0_9] : memref<1x128xf32, #tpu.memory_space<vmem>>, vector<1x128xf32>
    %18 = vector.broadcast %17 : vector<1x128xf32> to vector<16x128xf32>
    %19 = arith.addf %16, %18 : vector<16x128xf32>
    %20 = vector.extract_strided_slice %19 {offsets = [0, 0], sizes = [16, 64], strides = [1, 1]} : vector<16x128xf32> to vector<16x64xf32>
    %21 = vector.extract_strided_slice %19 {offsets = [0, 64], sizes = [16, 64], strides = [1, 1]} : vector<16x128xf32> to vector<16x64xf32>
    %22 = arith.negf %21 : vector<16x64xf32>
    %23 = math.exp %22 : vector<16x64xf32>
    %cst_10 = arith.constant 1.000000e+00 : f32
    %24 = vector.broadcast %cst_10 : f32 to vector<16x64xf32>
    %25 = arith.addf %24, %23 : vector<16x64xf32>
    %26 = arith.divf %24, %25 : vector<16x64xf32>
    %27 = arith.mulf %21, %26 : vector<16x64xf32>
    %28 = tpu.iota {dimensions = array<i32: 1>} : vector<16x64xi32>
    %c0_i32 = arith.constant 0 : i32
    %29 = vector.broadcast %c0_i32 : i32 to vector<16x64xi32>
    %30 = arith.cmpi eq, %28, %29 : vector<16x64xi32>
    %c1_i32 = arith.constant 1 : i32
    %31 = tpu.dynamic_rotate %20 by %c1_i32 dim 1 : vector<16x64xf32>, i32 -> vector<16x64xf32>
    %cst_11 = arith.constant 0.000000e+00 : f32
    %32 = vector.broadcast %cst_11 : f32 to vector<16x64xf32>
    %33 = arith.select %30, %32, %31 : vector<16x64xi1>, vector<16x64xf32>
    %c63_i32 = arith.constant 63 : i32
    %34 = vector.broadcast %c63_i32 : i32 to vector<16x64xi32>
    %35 = arith.cmpi eq, %28, %34 : vector<16x64xi32>
    %c63_i32_12 = arith.constant 63 : i32
    %36 = tpu.dynamic_rotate %20 by %c63_i32_12 dim 1 : vector<16x64xf32>, i32 -> vector<16x64xf32>
    %cst_13 = arith.constant 0.000000e+00 : f32
    %37 = vector.broadcast %cst_13 : f32 to vector<16x64xf32>
    %38 = arith.select %35, %37, %36 : vector<16x64xi1>, vector<16x64xf32>
    %c0_14 = arith.constant 0 : index
    %c0_15 = arith.constant 0 : index
    %39 = vector.load %arg5[%c0_14, %c0_15] : memref<8x24xf32, #tpu.memory_space<vmem>>, vector<8x24xf32>
    %c0_16 = arith.constant 0 : index
    %c0_17 = arith.constant 0 : index
    %40 = vector.load %arg6[%c0_16, %c0_17] : memref<8x1xf32, #tpu.memory_space<vmem>>, vector<8x1xf32>
    %41 = vector.extract_strided_slice %33 {offsets = [0, 0], sizes = [8, 64], strides = [1, 1]} : vector<16x64xf32> to vector<8x64xf32>
    %42 = vector.extract_strided_slice %20 {offsets = [0, 0], sizes = [8, 64], strides = [1, 1]} : vector<16x64xf32> to vector<8x64xf32>
    %43 = vector.extract_strided_slice %38 {offsets = [0, 0], sizes = [8, 64], strides = [1, 1]} : vector<16x64xf32> to vector<8x64xf32>
    %44 = tpu.concatenate %41, %42, %43 in 0 : vector<8x64xf32>, vector<8x64xf32>, vector<8x64xf32> -> vector<24x64xf32>
    %cst_18 = arith.constant dense<0.000000e+00> : vector<8x64xf32>
    %45 = tpu.matmul %39, %44, %cst_18 {dimension_numbers = #tpu.dot_dimension_numbers<[1], [0], [0], [1], [0, 0, 1, 1], [], []>} : vector<8x24xf32>, vector<24x64xf32>, vector<8x64xf32> -> vector<8x64xf32>
    %46 = vector.broadcast %40 : vector<8x1xf32> to vector<8x64xf32>
    %47 = arith.addf %45, %46 : vector<8x64xf32>
    %48 = vector.extract_strided_slice %33 {offsets = [8, 0], sizes = [8, 64], strides = [1, 1]} : vector<16x64xf32> to vector<8x64xf32>
    %49 = vector.extract_strided_slice %20 {offsets = [8, 0], sizes = [8, 64], strides = [1, 1]} : vector<16x64xf32> to vector<8x64xf32>
    %50 = vector.extract_strided_slice %38 {offsets = [8, 0], sizes = [8, 64], strides = [1, 1]} : vector<16x64xf32> to vector<8x64xf32>
    %51 = tpu.concatenate %48, %49, %50 in 0 : vector<8x64xf32>, vector<8x64xf32>, vector<8x64xf32> -> vector<24x64xf32>
    %cst_19 = arith.constant dense<0.000000e+00> : vector<8x64xf32>
    %52 = tpu.matmul %39, %51, %cst_19 {dimension_numbers = #tpu.dot_dimension_numbers<[1], [0], [0], [1], [0, 0, 1, 1], [], []>} : vector<8x24xf32>, vector<24x64xf32>, vector<8x64xf32> -> vector<8x64xf32>
    %53 = vector.broadcast %40 : vector<8x1xf32> to vector<8x64xf32>
    %54 = arith.addf %52, %53 : vector<8x64xf32>
    %55 = tpu.concatenate %47, %54 in 0 : vector<8x64xf32>, vector<8x64xf32> -> vector<16x64xf32>
    %56 = arith.negf %55 : vector<16x64xf32>
    %57 = math.exp %56 : vector<16x64xf32>
    %cst_20 = arith.constant 1.000000e+00 : f32
    %58 = vector.broadcast %cst_20 : f32 to vector<16x64xf32>
    %59 = arith.addf %58, %57 : vector<16x64xf32>
    %60 = arith.divf %58, %59 : vector<16x64xf32>
    %61 = arith.mulf %55, %60 : vector<16x64xf32>
    %62 = arith.truncf %61 : vector<16x64xf32> to vector<16x64xbf16>
    %c0_21 = arith.constant 0 : index
    %c0_22 = arith.constant 0 : index
    %63 = vector.load %arg7[%c0_21, %c0_22] : memref<64x64xbf16, #tpu.memory_space<vmem>>, vector<64x64xbf16>
    %cst_23 = arith.constant dense<0.000000e+00> : vector<16x64xf32>
    %64 = tpu.matmul %62, %63, %cst_23 {dimension_numbers = #tpu.dot_dimension_numbers<[1], [0], [0], [1], [0, 0, 1, 1], [], []>} : vector<16x64xbf16>, vector<64x64xbf16>, vector<16x64xf32> -> vector<16x64xf32>
    %c0_24 = arith.constant 0 : index
    %c0_25 = arith.constant 0 : index
    %65 = vector.load %arg8[%c0_24, %c0_25] : memref<1x64xf32, #tpu.memory_space<vmem>>, vector<1x64xf32>
    %66 = vector.broadcast %65 : vector<1x64xf32> to vector<16x64xf32>
    %67 = arith.addf %64, %66 : vector<16x64xf32>
    %68 = arith.truncf %67 : vector<16x64xf32> to vector<16x64xbf16>
    %c0_26 = arith.constant 0 : index
    %c0_27 = arith.constant 0 : index
    %69 = vector.load %arg9[%c0_26, %c0_27] : memref<64x96xbf16, #tpu.memory_space<vmem>>, vector<64x96xbf16>
    %cst_28 = arith.constant dense<0.000000e+00> : vector<16x96xf32>
    %70 = tpu.matmul %68, %69, %cst_28 {dimension_numbers = #tpu.dot_dimension_numbers<[1], [0], [0], [1], [0, 0, 1, 1], [], []>} : vector<16x64xbf16>, vector<64x96xbf16>, vector<16x96xf32> -> vector<16x96xf32>
    %c0_29 = arith.constant 0 : index
    %c0_30 = arith.constant 0 : index
    %71 = vector.load %arg10[%c0_29, %c0_30] : memref<1x96xf32, #tpu.memory_space<vmem>>, vector<1x96xf32>
    %72 = vector.broadcast %71 : vector<1x96xf32> to vector<16x96xf32>
    %73 = arith.addf %70, %72 : vector<16x96xf32>
    %74 = vector.extract_strided_slice %73 {offsets = [0, 0], sizes = [16, 64], strides = [1, 1]} : vector<16x96xf32> to vector<16x64xf32>
    %cst_31 = arith.constant 2.000000e+01 : f32
    %75 = vector.broadcast %cst_31 : f32 to vector<16x64xf32>
    %76 = arith.cmpf ogt, %74, %75 : vector<16x64xf32>
    %cst_32 = arith.constant 2.000000e+01 : f32
    %77 = vector.broadcast %cst_32 : f32 to vector<16x64xf32>
    %78 = arith.minimumf %74, %77 : vector<16x64xf32>
    %79 = math.exp %78 : vector<16x64xf32>
    %80 = math.log1p %79 : vector<16x64xf32>
    %81 = arith.select %76, %74, %80 : vector<16x64xi1>, vector<16x64xf32>
    %82 = vector.extract_strided_slice %73 {offsets = [0, 64], sizes = [16, 16], strides = [1, 1]} : vector<16x96xf32> to vector<16x16xf32>
    %83 = vector.extract_strided_slice %73 {offsets = [0, 80], sizes = [16, 16], strides = [1, 1]} : vector<16x96xf32> to vector<16x16xf32>
    %84 = arith.mulf %82, %83 : vector<16x16xf32>
    %cst_33 = arith.constant dense<0.000000e+00> : vector<16xf32>
    %85 = vector.multi_reduction <add>, %84, %cst_33 [1] : vector<16x16xf32> to vector<16xf32>
    %86 = vector.shape_cast %85 : vector<16xf32> to vector<16x1xf32>
    %87 = arith.mulf %67, %81 : vector<16x64xf32>
    %88 = vector.broadcast %86 : vector<16x1xf32> to vector<16x64xf32>
    %89 = arith.mulf %87, %88 : vector<16x64xf32>
    %90 = arith.negf %89 : vector<16x64xf32>
    %91 = math.exp %90 : vector<16x64xf32>
    %cst_34 = arith.constant 1.000000e+00 : f32
    %92 = vector.broadcast %cst_34 : f32 to vector<16x64xf32>
    %93 = arith.addf %92, %91 : vector<16x64xf32>
    %94 = arith.divf %92, %93 : vector<16x64xf32>
    %95 = arith.mulf %89, %94 : vector<16x64xf32>
    %96 = arith.mulf %95, %27 : vector<16x64xf32>
    %97 = arith.truncf %96 : vector<16x64xf32> to vector<16x64xbf16>
    %c0_35 = arith.constant 0 : index
    %c0_36 = arith.constant 0 : index
    %98 = vector.load %arg11[%c0_35, %c0_36] : memref<64x32xbf16, #tpu.memory_space<vmem>>, vector<64x32xbf16>
    %cst_37 = arith.constant dense<0.000000e+00> : vector<16x32xf32>
    %99 = tpu.matmul %97, %98, %cst_37 {dimension_numbers = #tpu.dot_dimension_numbers<[1], [0], [0], [1], [0, 0, 1, 1], [], []>} : vector<16x64xbf16>, vector<64x32xbf16>, vector<16x32xf32> -> vector<16x32xf32>
    %c0_38 = arith.constant 0 : index
    %c0_39 = arith.constant 0 : index
    %100 = vector.load %arg12[%c0_38, %c0_39] : memref<1x32xf32, #tpu.memory_space<vmem>>, vector<1x32xf32>
    %101 = vector.broadcast %100 : vector<1x32xf32> to vector<16x32xf32>
    %102 = arith.addf %99, %101 : vector<16x32xf32>
    %c0_40 = arith.constant 0 : index
    %c0_41 = arith.constant 0 : index
    %103 = vector.load %arg13[%c0_40, %c0_41] : memref<16x32xf32, #tpu.memory_space<vmem>>, vector<16x32xf32>
    tpu.vector_store %arg13[%c0_40, %c0_41], %102 {strides = array<i32>} : memref<16x32xf32, #tpu.memory_space<vmem>>, vector<16x32xf32>,
    return
  }
  func.func @transform_0(%arg0: i32) -> (i32, i32) {
    %c0_i32 = arith.constant 0 : i32
    %c0_i32_0 = arith.constant 0 : i32
    return %arg0, %c0_i32 : i32, i32
  }
  func.func @transform_1(%arg0: i32) -> (i32, i32) {
    %c0_i32 = arith.constant 0 : i32
    %c0_i32_0 = arith.constant 0 : i32
    %c0_i32_1 = arith.constant 0 : i32
    return %c0_i32, %c0_i32_0 : i32, i32
  }
  func.func @transform_2(%arg0: i32) -> (i32, i32) {
    %c0_i32 = arith.constant 0 : i32
    %c0_i32_0 = arith.constant 0 : i32
    %c0_i32_1 = arith.constant 0 : i32
    return %c0_i32, %c0_i32_0 : i32, i32
  }
  func.func @transform_3(%arg0: i32) -> (i32, i32) {
    %c0_i32 = arith.constant 0 : i32
    %c0_i32_0 = arith.constant 0 : i32
    %c0_i32_1 = arith.constant 0 : i32
    return %c0_i32, %c0_i32_0 : i32, i32
  }
  func.func @transform_4(%arg0: i32) -> (i32, i32) {
    %c0_i32 = arith.constant 0 : i32
    %c0_i32_0 = arith.constant 0 : i32
    %c0_i32_1 = arith.constant 0 : i32
    return %c0_i32, %c0_i32_0 : i32, i32
  }
  func.func @transform_5(%arg0: i32) -> (i32, i32) {
    %c0_i32 = arith.constant 0 : i32
    %c0_i32_0 = arith.constant 0 : i32
    %c0_i32_1 = arith.constant 0 : i32
    return %c0_i32, %c0_i32_0 : i32, i32
  }
  func.func @transform_6(%arg0: i32) -> (i32, i32) {
    %c0_i32 = arith.constant 0 : i32
    %c0_i32_0 = arith.constant 0 : i32
    %c0_i32_1 = arith.constant 0 : i32
    return %c0_i32, %c0_i32_0 : i32, i32
  }
  func.func @transform_7(%arg0: i32) -> (i32, i32) {
    %c0_i32 = arith.constant 0 : i32
    %c0_i32_0 = arith.constant 0 : i32
    %c0_i32_1 = arith.constant 0 : i32
    return %c0_i32, %c0_i32_0 : i32, i32
  }
  func.func @transform_8(%arg0: i32) -> (i32, i32) {
    %c0_i32 = arith.constant 0 : i32
    %c0_i32_0 = arith.constant 0 : i32
    %c0_i32_1 = arith.constant 0 : i32
    return %c0_i32, %c0_i32_0 : i32, i32
  }
  func.func @transform_9(%arg0: i32) -> (i32, i32) {
    %c0_i32 = arith.constant 0 : i32
    %c0_i32_0 = arith.constant 0 : i32
    %c0_i32_1 = arith.constant 0 : i32
    return %c0_i32, %c0_i32_0 : i32, i32
  }
  func.func @transform_10(%arg0: i32) -> (i32, i32) {
    %c0_i32 = arith.constant 0 : i32
    %c0_i32_0 = arith.constant 0 : i32
    %c0_i32_1 = arith.constant 0 : i32
    return %c0_i32, %c0_i32_0 : i32, i32
  }
  func.func @transform_11(%arg0: i32) -> (i32, i32) {
    %c0_i32 = arith.constant 0 : i32
    %c0_i32_0 = arith.constant 0 : i32
    %c0_i32_1 = arith.constant 0 : i32
    return %c0_i32, %c0_i32_0 : i32, i32
  }
  func.func @transform_12(%arg0: i32) -> (i32, i32) {
    %c0_i32 = arith.constant 0 : i32
    %c0_i32_0 = arith.constant 0 : i32
    return %arg0, %c0_i32 : i32, i32
  }
}

</mosaic_0001>

<llo_original>
// kernel: fwd.1
$region0: #{fwd.1}
  #allocation0 [shape = 'u32[]', space=smem, size = 0x4, offset = 0x4, fixed_abs, tag = 'smem constant byte address 0x4 - core index']
  #allocation1 [shape = 'u32[144,128]{1,0:T(1,128)}', space=vmem, size = 0x12000, scoped, tag = 'internal scratch']
  %s0 = inlined_call_operand.vmem [shape: f32[32,32], index: 0, kind: input, shape index: {}]
  %s1 = inlined_call_operand.hbm [shape: f32[1,32], index: 1, kind: input, shape index: {}]
  %s2 = inlined_call_operand.hbm [shape: bf16[32,128], index: 2, kind: input, shape index: {}]
  %s3 = inlined_call_operand.hbm [shape: f32[1,128], index: 3, kind: input, shape index: {}]
  %s4 = inlined_call_operand.hbm [shape: f32[8,24], index: 4, kind: input, shape index: {}]
  %s5 = inlined_call_operand.vmem [shape: f32[8,1], index: 5, kind: input, shape index: {}]
  %s6 = inlined_call_operand.vmem [shape: bf16[64,64], index: 6, kind: input, shape index: {}]
  %s7 = inlined_call_operand.vmem [shape: f32[1,64], index: 7, kind: input, shape index: {}]
  %s8 = inlined_call_operand.hbm [shape: bf16[64,96], index: 8, kind: input, shape index: {}]
  %s9 = inlined_call_operand.vmem [shape: f32[1,96], index: 9, kind: input, shape index: {}]
  %s10 = inlined_call_operand.vmem [shape: bf16[64,32], index: 10, kind: input, shape index: {}]
  %s11 = inlined_call_operand.vmem [shape: f32[1,32], index: 11, kind: input, shape index: {}]
  %s12 = inlined_call_operand.hbm [shape: f32[32,32], index: 12, kind: output, shape index: {}]
  %s13 = sld [smem:[#allocation0]]
  $region101: #{fwd.1} parent=0
    _
  %s15 = ssub.s32 1, %s13
  %s16 = scalar_select 0, %s15, %s13
  $region1: #{fwd.1} parent=0
    #allocation2 [shape = 'u8[512]{0}', space=vmem, size = 0x400, scoped, tag = 'input window, operand 1, single buffered']
    #allocation3 [shape = 's32[2]{0}', space=sflag, size = 0x8, scoped, tag = 'scoped memory for fwd.1']
    #allocation4 [shape = 's32[2]{0}', space=sflag, size = 0x8, scoped, tag = 'scoped memory for fwd.1']
    #allocation5 [shape = 'u8[8192]{0}', space=vmem, size = 0x2000, scoped, tag = 'input window, operand 2, single buffered']
    #allocation6 [shape = 's32[1]{0}', space=sflag, size = 0x4, scoped, tag = 'scoped memory for fwd.1']
    #allocation7 [shape = 'u8[512]{0}', space=vmem, size = 0x400, scoped, tag = 'input window, operand 3, single buffered']
    #allocation8 [shape = 'u8[4096]{0}', space=vmem, size = 0x1000, scoped, tag = 'input window, operand 4, single buffered']
    #allocation9 [shape = 's32[1]{0}', space=sflag, size = 0x4, scoped, tag = 'scoped memory for fwd.1']
    #allocation10 [shape = 'u8[16384]{0}', space=vmem, size = 0x4000, scoped, tag = 'input window, operand 8, single buffered']
    #allocation11 [shape = 'u8[16384]{0}', space=vmem, size = 0x4000, scoped, tag = 'output window, operand 0']
    %17 = vsyncpa [#allocation3], 0
    %18 = vsyncpa [#allocation6], 0
    %19 = vsyncpa [#allocation9], 0
    %20 = vsyncpa [#allocation4], 0
    %s21 = scalar_lea.sflag [#allocation4], 1
    %22 = vsyncpa %s21, 0
    loop: start=0, step=1, limit=4
    $region2: #{fwd.1} parent=1 // loop_pre_header
      _
    $region3: #{fwd.1} parent=1 // loop_header
      %s24 = sphi 0, %s28
      %p25 = scmp.ge.s32.totalorder %s24, 4
      %s34 = sphi 0, %s36
      %s37 = sphi 0, %s34
      %s38 = sphi 0, %s37
      %s54 = sphi 0, %s38
      %s58 = sphi 0, %s58
      %s60 = sphi 0, %s58
      %s61 = sphi 0, %s60
      %s75 = sphi 0, %s61
      %s79 = sphi 0, %s79
      %s81 = sphi 0, %s79
      %s82 = sphi 0, %s81
      %s96 = sphi 0, %s82
      %s100 = sphi 0, %s100
      %s102 = sphi 0, %s100
      %s103 = sphi 0, %s102
      %s117 = sphi 0, %s103
      %s121 = sphi 0, %s121
      %s123 = sphi 0, %s121
      %s124 = sphi 0, %s123
      %s138 = sphi 0, %s124
      %s142 = sphi 0, %s142
      %s144 = sphi 0, %s142
      %s145 = sphi 0, %s144
      %s159 = sphi 0, %s145
      %s163 = sphi 0, %s163
      %s165 = sphi 0, %s163
      %s166 = sphi 0, %s165
      %s180 = sphi 0, %s166
      %s184 = sphi 0, %s184
      %s186 = sphi 0, %s184
      %s187 = sphi 0, %s186
      %s201 = sphi 0, %s187
      %s205 = sphi 0, %s205
      %s207 = sphi 0, %s205
      %s208 = sphi 0, %s207
      %s222 = sphi 0, %s208
      %s226 = sphi 0, %s226
      %s228 = sphi 0, %s226
      %s229 = sphi 0, %s228
      %s243 = sphi 0, %s229
      %s247 = sphi 0, %s247
      %s249 = sphi 0, %s247
      %s250 = sphi 0, %s249
      %s264 = sphi 0, %s250
      %s268 = sphi 0, %s268
      %s270 = sphi 0, %s268
      %s271 = sphi 0, %s270
      %s285 = sphi 0, %s271
      %s291 = sphi 0, %s293
      %s294 = sphi 0, %s291
      %s295 = sphi 0, %s294
      %s311 = sphi 0, %s295
    $region4: #{fwd.1} parent=1 // loop_header_branch
      %27 = sbr.rel (%p25) target = $region8
    $region5: #{fwd.1} parent=1 // loop_body
      %s29 = ssub.s32 %s24, 1
      %s30 = ssub.s32 %s24, 2
      %s31 = sadd.s32 %s24, 1
      %s32 = ssub.s32 %s24, %s31
      %p33 = scmp.eq.s32.totalorder %s32, 0
      %s35 = sadd.s32 %s34, 1
      %s36 = scalar_select %p33, %s34, %s35
      %p39 = pneg %p33
      %p40 = scmp.eq.s32.totalorder %s24, 1
      %p41 = por %p39, %p40
      %p42 = scmp.ne.s32.totalorder %s34, %s37
      %p43 = scmp.eq.s32.totalorder %s24, 0
      %p44 = por %p42, %p43
      %p45 = scmp.ne.s32.totalorder %s34, %s37
      %p46 = scmp.eq.s32.totalorder %s29, 1
      %p47 = por %p45, %p46
      %p48 = scmp.ne.s32.totalorder %s37, %s38
      %p49 = scmp.eq.s32.totalorder %s29, 0
      %p50 = por %p48, %p49
      %p51 = scmp.ne.s32.totalorder %s37, %s38
      %p52 = scmp.eq.s32.totalorder %s30, 1
      %p53 = por %p51, %p52
      %p55 = scmp.ne.s32.totalorder %s38, %s54
      %p56 = scmp.eq.s32.totalorder %s30, 0
      %p57 = por %p55, %p56
      %s59 = sadd.s32 %s58, 1
      %p62 = scmp.eq.s32.totalorder %s24, 1
      %p63 = scmp.ne.s32.totalorder %s58, %s60
      %p64 = scmp.eq.s32.totalorder %s24, 0
      %p65 = por %p63, %p64
      %p66 = scmp.ne.s32.totalorder %s58, %s60
      %p67 = scmp.eq.s32.totalorder %s29, 1
      %p68 = por %p66, %p67
      %p69 = scmp.ne.s32.totalorder %s60, %s61
      %p70 = scmp.eq.s32.totalorder %s29, 0
      %p71 = por %p69, %p70
      %p72 = scmp.ne.s32.totalorder %s60, %s61
      %p73 = scmp.eq.s32.totalorder %s30, 1
      %p74 = por %p72, %p73
      %p76 = scmp.ne.s32.totalorder %s61, %s75
      %p77 = scmp.eq.s32.totalorder %s30, 0
      %p78 = por %p76, %p77
      %s80 = sadd.s32 %s79, 1
      %p83 = scmp.eq.s32.totalorder %s24, 1
      %p84 = scmp.ne.s32.totalorder %s79, %s81
      %p85 = scmp.eq.s32.totalorder %s24, 0
      %p86 = por %p84, %p85
      %p87 = scmp.ne.s32.totalorder %s79, %s81
      %p88 = scmp.eq.s32.totalorder %s29, 1
      %p89 = por %p87, %p88
      %p90 = scmp.ne.s32.totalorder %s81, %s82
      %p91 = scmp.eq.s32.totalorder %s29, 0
      %p92 = por %p90, %p91
      %p93 = scmp.ne.s32.totalorder %s81, %s82
      %p94 = scmp.eq.s32.totalorder %s30, 1
      %p95 = por %p93, %p94
      %p97 = scmp.ne.s32.totalorder %s82, %s96
      %p98 = scmp.eq.s32.totalorder %s30, 0
      %p99 = por %p97, %p98
      %s101 = sadd.s32 %s100, 1
      %p104 = scmp.eq.s32.totalorder %s24, 1
      %p105 = scmp.ne.s32.totalorder %s100, %s102
      %p106 = scmp.eq.s32.totalorder %s24, 0
      %p107 = por %p105, %p106
      %p108 = scmp.ne.s32.totalorder %s100, %s102
      %p109 = scmp.eq.s32.totalorder %s29, 1
      %p110 = por %p108, %p109
      %p111 = scmp.ne.s32.totalorder %s102, %s103
      %p112 = scmp.eq.s32.totalorder %s29, 0
      %p113 = por %p111, %p112
      %p114 = scmp.ne.s32.totalorder %s102, %s103
      %p115 = scmp.eq.s32.totalorder %s30, 1
      %p116 = por %p114, %p115
      %p118 = scmp.ne.s32.totalorder %s103, %s117
      %p119 = scmp.eq.s32.totalorder %s30, 0
      %p120 = por %p118, %p119
      %s122 = sadd.s32 %s121, 1
      %p125 = scmp.eq.s32.totalorder %s24, 1
      %p126 = scmp.ne.s32.totalorder %s121, %s123
      %p127 = scmp.eq.s32.totalorder %s24, 0
      %p128 = por %p126, %p127
      %p129 = scmp.ne.s32.totalorder %s121, %s123
      %p130 = scmp.eq.s32.totalorder %s29, 1
      %p131 = por %p129, %p130
      %p132 = scmp.ne.s32.totalorder %s123, %s124
      %p133 = scmp.eq.s32.totalorder %s29, 0
      %p134 = por %p132, %p133
      %p135 = scmp.ne.s32.totalorder %s123, %s124
      %p136 = scmp.eq.s32.totalorder %s30, 1
      %p137 = por %p135, %p136
      %p139 = scmp.ne.s32.totalorder %s124, %s138
      %p140 = scmp.eq.s32.totalorder %s30, 0
      %p141 = por %p139, %p140
      %s143 = sadd.s32 %s142, 1
      %p146 = scmp.eq.s32.totalorder %s24, 1
      %p147 = scmp.ne.s32.totalorder %s142, %s144
      %p148 = scmp.eq.s32.totalorder %s24, 0
      %p149 = por %p147, %p148
      %p150 = scmp.ne.s32.totalorder %s142, %s144
      %p151 = scmp.eq.s32.totalorder %s29, 1
      %p152 = por %p150, %p151
      %p153 = scmp.ne.s32.totalorder %s144, %s145
      %p154 = scmp.eq.s32.totalorder %s29, 0
      %p155 = por %p153, %p154
      %p156 = scmp.ne.s32.totalorder %s144, %s145
      %p157 = scmp.eq.s32.totalorder %s30, 1
      %p158 = por %p156, %p157
      %p160 = scmp.ne.s32.totalorder %s145, %s159
      %p161 = scmp.eq.s32.totalorder %s30, 0
      %p162 = por %p160, %p161
      %s164 = sadd.s32 %s163, 1
      %p167 = scmp.eq.s32.totalorder %s24, 1
      %p168 = scmp.ne.s32.totalorder %s163, %s165
      %p169 = scmp.eq.s32.totalorder %s24, 0
      %p170 = por %p168, %p169
      %p171 = scmp.ne.s32.totalorder %s163, %s165
      %p172 = scmp.eq.s32.totalorder %s29, 1
      %p173 = por %p171, %p172
      %p174 = scmp.ne.s32.totalorder %s165, %s166
      %p175 = scmp.eq.s32.totalorder %s29, 0
      %p176 = por %p174, %p175
      %p177 = scmp.ne.s32.totalorder %s165, %s166
      %p178 = scmp.eq.s32.totalorder %s30, 1
      %p179 = por %p177, %p178
      %p181 = scmp.ne.s32.totalorder %s166, %s180
      %p182 = scmp.eq.s32.totalorder %s30, 0
      %p183 = por %p181, %p182
      %s185 = sadd.s32 %s184, 1
      %p188 = scmp.eq.s32.totalorder %s24, 1
      %p189 = scmp.ne.s32.totalorder %s184, %s186
      %p190 = scmp.eq.s32.totalorder %s24, 0
      %p191 = por %p189, %p190
      %p192 = scmp.ne.s32.totalorder %s184, %s186
      %p193 = scmp.eq.s32.totalorder %s29, 1
      %p194 = por %p192, %p193
      %p195 = scmp.ne.s32.totalorder %s186, %s187
      %p196 = scmp.eq.s32.totalorder %s29, 0
      %p197 = por %p195, %p196
      %p198 = scmp.ne.s32.totalorder %s186, %s187
      %p199 = scmp.eq.s32.totalorder %s30, 1
      %p200 = por %p198, %p199
      %p202 = scmp.ne.s32.totalorder %s187, %s201
      %p203 = scmp.eq.s32.totalorder %s30, 0
      %p204 = por %p202, %p203
      %s206 = sadd.s32 %s205, 1
      %p209 = scmp.eq.s32.totalorder %s24, 1
      %p210 = scmp.ne.s32.totalorder %s205, %s207
      %p211 = scmp.eq.s32.totalorder %s24, 0
      %p212 = por %p210, %p211
      %p213 = scmp.ne.s32.totalorder %s205, %s207
      %p214 = scmp.eq.s32.totalorder %s29, 1
      %p215 = por %p213, %p214
      %p216 = scmp.ne.s32.totalorder %s207, %s208
      %p217 = scmp.eq.s32.totalorder %s29, 0
      %p218 = por %p216, %p217
      %p219 = scmp.ne.s32.totalorder %s207, %s208
      %p220 = scmp.eq.s32.totalorder %s30, 1
      %p221 = por %p219, %p220
      %p223 = scmp.ne.s32.totalorder %s208, %s222
      %p224 = scmp.eq.s32.totalorder %s30, 0
      %p225 = por %p223, %p224
      %s227 = sadd.s32 %s226, 1
      %p230 = scmp.eq.s32.totalorder %s24, 1
      %p231 = scmp.ne.s32.totalorder %s226, %s228
      %p232 = scmp.eq.s32.totalorder %s24, 0
      %p233 = por %p231, %p232
      %p234 = scmp.ne.s32.totalorder %s226, %s228
      %p235 = scmp.eq.s32.totalorder %s29, 1
      %p236 = por %p234, %p235
      %p237 = scmp.ne.s32.totalorder %s228, %s229
      %p238 = scmp.eq.s32.totalorder %s29, 0
      %p239 = por %p237, %p238
      %p240 = scmp.ne.s32.totalorder %s228, %s229
      %p241 = scmp.eq.s32.totalorder %s30, 1
      %p242 = por %p240, %p241
      %p244 = scmp.ne.s32.totalorder %s229, %s243
      %p245 = scmp.eq.s32.totalorder %s30, 0
      %p246 = por %p244, %p245
      %s248 = sadd.s32 %s247, 1
      %p251 = scmp.eq.s32.totalorder %s24, 1
      %p252 = scmp.ne.s32.totalorder %s247, %s249
      %p253 = scmp.eq.s32.totalorder %s24, 0
      %p254 = por %p252, %p253
      %p255 = scmp.ne.s32.totalorder %s247, %s249
      %p256 = scmp.eq.s32.totalorder %s29, 1
      %p257 = por %p255, %p256
      %p258 = scmp.ne.s32.totalorder %s249, %s250
      %p259 = scmp.eq.s32.totalorder %s29, 0
      %p260 = por %p258, %p259
      %p261 = scmp.ne.s32.totalorder %s249, %s250
      %p262 = scmp.eq.s32.totalorder %s30, 1
      %p263 = por %p261, %p262
      %p265 = scmp.ne.s32.totalorder %s250, %s264
      %p266 = scmp.eq.s32.totalorder %s30, 0
      %p267 = por %p265, %p266
      %s269 = sadd.s32 %s268, 1
      %p272 = scmp.eq.s32.totalorder %s24, 1
      %p273 = scmp.ne.s32.totalorder %s268, %s270
      %p274 = scmp.eq.s32.totalorder %s24, 0
      %p275 = por %p273, %p274
      %p276 = scmp.ne.s32.totalorder %s268, %s270
      %p277 = scmp.eq.s32.totalorder %s29, 1
      %p278 = por %p276, %p277
      %p279 = scmp.ne.s32.totalorder %s270, %s271
      %p280 = scmp.eq.s32.totalorder %s29, 0
      %p281 = por %p279, %p280
      %p282 = scmp.ne.s32.totalorder %s270, %s271
      %p283 = scmp.eq.s32.totalorder %s30, 1
      %p284 = por %p282, %p283
      %p286 = scmp.ne.s32.totalorder %s271, %s285
      %p287 = scmp.eq.s32.totalorder %s30, 0
      %p288 = por %p286, %p287
      %s289 = ssub.s32 %s24, %s31
      %p290 = scmp.eq.s32.totalorder %s289, 0
      %s292 = sadd.s32 %s291, 1
      %s293 = scalar_select %p290, %s291, %s292
      %p296 = pneg %p290
      %p297 = scmp.eq.s32.totalorder %s24, 1
      %p298 = por %p296, %p297
      %p299 = scmp.ne.s32.totalorder %s291, %s294
      %p300 = scmp.eq.s32.totalorder %s24, 0
      %p301 = por %p299, %p300
      %p302 = scmp.ne.s32.totalorder %s291, %s294
      %p303 = scmp.eq.s32.totalorder %s29, 1
      %p304 = por %p302, %p303
      %p305 = scmp.ne.s32.totalorder %s294, %s295
      %p306 = scmp.eq.s32.totalorder %s29, 0
      %p307 = por %p305, %p306
      %p308 = scmp.ne.s32.totalorder %s294, %s295
      %p309 = scmp.eq.s32.totalorder %s30, 1
      %p310 = por %p308, %p309
      %p312 = scmp.ne.s32.totalorder %s295, %s311
      %p313 = scmp.eq.s32.totalorder %s30, 0
      %p314 = por %p312, %p313
      %p315 = scmp.le.s32.totalorder 1, %s24
      %p316 = scmp.lt.s32.totalorder %s24, 3
      %p317 = pnand %p315, %p316
      %p318 = pneg %p317
      // Predicated region
      $region9: #{fwd.1} parent=5 // pred_check
        _
      $region10: #{fwd.1} parent=5 // pred_check_branch
        %320 = sbr.rel (%p317) target = $region12
      $region11: #{fwd.1} parent=5 // pred_region
        %s321 = ssub.s32 %s24, 1
        // Predicated region
        $region13: #{fwd.1} parent=11 // pred_check
          %p322 = pneg %p71
        $region14: #{fwd.1} parent=11 // pred_check_branch
          %324 = sbr.rel (%p322) target = $region16
        $region15: #{fwd.1} parent=11 // pred_region
          %s326 = ssub.s32 16, 16
          %327 = vsyncadd [#allocation3], %s326
          %s329 = sshll.u32 [#allocation2], 4
          %s330 = int_to_ptr.vmem [resolvable:$true] %s329
          %332 = dma.hbm_to_vmem [thread:$0]  %s1, 16, %s330, [#allocation3]
        $region16: #{fwd.1} parent=11 // pred_fallthru
          _
        // Predicated region
        $region17: #{fwd.1} parent=11 // pred_check
          %p333 = pneg %p92
        $region18: #{fwd.1} parent=11 // pred_check_branch
          %335 = sbr.rel (%p333) target = $region20
        $region19: #{fwd.1} parent=11 // pred_region
          %s337 = ssub.s32 256, 256
          %338 = vsyncadd [#allocation6], %s337
          %s339 = sshll.u32 [#allocation5], 4
          %s340 = int_to_ptr.vmem [resolvable:$true] %s339
          %345 = dma.hbm_to_vmem [thread:$0]  %s2, 256, %s340, [#allocation6], 64, 64, 4
        $region20: #{fwd.1} parent=11 // pred_fallthru
          _
        // Predicated region
        $region21: #{fwd.1} parent=11 // pred_check
          %p346 = pneg %p113
        $region22: #{fwd.1} parent=11 // pred_check_branch
          %348 = sbr.rel (%p346) target = $region24
        $region23: #{fwd.1} parent=11 // pred_region
          %s350 = ssub.s32 16, 16
          %351 = vsyncadd [#allocation6], %s350
          %s353 = sshll.u32 [#allocation7], 4
          %s354 = int_to_ptr.vmem [resolvable:$true] %s353
          %356 = dma.hbm_to_vmem [thread:$0]  %s3, 16, %s354, [#allocation6]
        $region24: #{fwd.1} parent=11 // pred_fallthru
          _
        // Predicated region
        $region25: #{fwd.1} parent=11 // pred_check
          %p357 = pneg %p134
        $region26: #{fwd.1} parent=11 // pred_check_branch
          %359 = sbr.rel (%p357) target = $region28
        $region27: #{fwd.1} parent=11 // pred_region
          %s361 = ssub.s32 128, 128
          %362 = vsyncadd [#allocation9], %s361
          %s364 = sshll.u32 [#allocation8], 4
          %s365 = int_to_ptr.vmem [resolvable:$true] %s364
          %367 = dma.hbm_to_vmem [thread:$0]  %s4, 128, %s365, [#allocation9]
        $region28: #{fwd.1} parent=11 // pred_fallthru
          _
        // Predicated region
        $region29: #{fwd.1} parent=11 // pred_check
          %p368 = pneg %p155
        $region30: #{fwd.1} parent=11 // pred_check_branch
          %370 = sbr.rel (%p368) target = $region32
        $region31: #{fwd.1} parent=11 // pred_region
          _
        $region32: #{fwd.1} parent=11 // pred_fallthru
          _
        // Predicated region
        $region33: #{fwd.1} parent=11 // pred_check
          %p371 = pneg %p176
        $region34: #{fwd.1} parent=11 // pred_check_branch
          %373 = sbr.rel (%p371) target = $region36
        $region35: #{fwd.1} parent=11 // pred_region
          _
        $region36: #{fwd.1} parent=11 // pred_fallthru
          _
        // Predicated region
        $region37: #{fwd.1} parent=11 // pred_check
          %p374 = pneg %p197
        $region38: #{fwd.1} parent=11 // pred_check_branch
          %376 = sbr.rel (%p374) target = $region40
        $region39: #{fwd.1} parent=11 // pred_region
          _
        $region40: #{fwd.1} parent=11 // pred_fallthru
          _
        // Predicated region
        $region41: #{fwd.1} parent=11 // pred_check
          %p377 = pneg %p218
        $region42: #{fwd.1} parent=11 // pred_check_branch
          %379 = sbr.rel (%p377) target = $region44
        $region43: #{fwd.1} parent=11 // pred_region
          %s381 = ssub.s32 512, 512
          %382 = vsyncadd [#allocation9], %s381
          %s383 = sshll.u32 [#allocation10], 4
          %s384 = int_to_ptr.vmem [resolvable:$true] %s383
          %389 = dma.hbm_to_vmem [thread:$0]  %s8, 512, %s384, [#allocation9], 64, 64, 4
        $region44: #{fwd.1} parent=11 // pred_fallthru
          _
        // Predicated region
        $region45: #{fwd.1} parent=11 // pred_check
          %p390 = pneg %p239
        $region46: #{fwd.1} parent=11 // pred_check_branch
          %392 = sbr.rel (%p390) target = $region48
        $region47: #{fwd.1} parent=11 // pred_region
          _
        $region48: #{fwd.1} parent=11 // pred_fallthru
          _
        // Predicated region
        $region49: #{fwd.1} parent=11 // pred_check
          %p393 = pneg %p260
        $region50: #{fwd.1} parent=11 // pred_check_branch
          %395 = sbr.rel (%p393) target = $region52
        $region51: #{fwd.1} parent=11 // pred_region
          _
        $region52: #{fwd.1} parent=11 // pred_fallthru
          _
        // Predicated region
        $region53: #{fwd.1} parent=11 // pred_check
          %p396 = pneg %p281
        $region54: #{fwd.1} parent=11 // pred_check_branch
          %398 = sbr.rel (%p396) target = $region56
        $region55: #{fwd.1} parent=11 // pred_region
          _
        $region56: #{fwd.1} parent=11 // pred_fallthru
          _
      $region12: #{fwd.1} parent=5 // pred_fallthru
        _
      %p399 = scmp.lt.s32.totalorder %s24, 2
      // Predicated region
      $region57: #{fwd.1} parent=5 // pred_check
        %p400 = pneg %p399
      $region58: #{fwd.1} parent=5 // pred_check_branch
        %402 = sbr.rel (%p400) target = $region60
      $region59: #{fwd.1} parent=5 // pred_region
        // Predicated region
        $region61: #{fwd.1} parent=59 // pred_check
          %p403 = pneg %p44
        $region62: #{fwd.1} parent=59 // pred_check_branch
          %405 = sbr.rel (%p403) target = $region64
        $region63: #{fwd.1} parent=59 // pred_region
          %s406 = smul.u32 2, %s24
          %p407 = scmp.lt.s32.totalorder %s406, 3
          %s408 = scalar_select %p407, %s406, 3
          %s409 = smul.addr %s408, 8
          %s410 = scalar_lea.vmem %s0, %s409
          %s411 = smul.u32 2, %s24
        $region64: #{fwd.1} parent=59 // pred_fallthru
          _
      $region60: #{fwd.1} parent=5 // pred_fallthru
        _
      %p412 = scmp.le.s32.totalorder 1, %s24
      %p413 = scmp.lt.s32.totalorder %s24, 3
      %p414 = pnand %p412, %p413
      %p415 = pneg %p414
      // Predicated region
      $region65: #{fwd.1} parent=5 // pred_check
        _
      $region66: #{fwd.1} parent=5 // pred_check_branch
        %417 = sbr.rel (%p414) target = $region68
      $region67: #{fwd.1} parent=5 // pred_region
        %s418 = ssub.s32 %s24, 1
        // Predicated region
        $region69: #{fwd.1} parent=67 // pred_check
          %p419 = pneg %p71
        $region70: #{fwd.1} parent=67 // pred_check_branch
          %421 = sbr.rel (%p419) target = $region72
        $region71: #{fwd.1} parent=67 // pred_region
          %422 = dma.done [#allocation3], 16
        $region72: #{fwd.1} parent=67 // pred_fallthru
          _
        // Predicated region
        $region73: #{fwd.1} parent=67 // pred_check
          %p423 = pneg %p92
        $region74: #{fwd.1} parent=67 // pred_check_branch
          %425 = sbr.rel (%p423) target = $region76
        $region75: #{fwd.1} parent=67 // pred_region
          %426 = dma.done [#allocation6], 256
        $region76: #{fwd.1} parent=67 // pred_fallthru
          _
        // Predicated region
        $region77: #{fwd.1} parent=67 // pred_check
          %p427 = pneg %p113
        $region78: #{fwd.1} parent=67 // pred_check_branch
          %429 = sbr.rel (%p427) target = $region80
        $region79: #{fwd.1} parent=67 // pred_region
          %430 = dma.done [#allocation6], 16
        $region80: #{fwd.1} parent=67 // pred_fallthru
          _
        // Predicated region
        $region81: #{fwd.1} parent=67 // pred_check
          %p431 = pneg %p134
        $region82: #{fwd.1} parent=67 // pred_check_branch
          %433 = sbr.rel (%p431) target = $region84
        $region83: #{fwd.1} parent=67 // pred_region
          %434 = dma.done [#allocation9], 128
        $region84: #{fwd.1} parent=67 // pred_fallthru
          _
        // Predicated region
        $region85: #{fwd.1} parent=67 // pred_check
          %p435 = pneg %p218
        $region86: #{fwd.1} parent=67 // pred_check_branch
          %437 = sbr.rel (%p435) target = $region88
        $region87: #{fwd.1} parent=67 // pred_region
          %438 = dma.done [#allocation9], 512
        $region88: #{fwd.1} parent=67 // pred_fallthru
          _
        %s439 = smul.u32 2, %s29
        %p440 = scmp.lt.s32.totalorder %s439, 3
        %s441 = scalar_select %p440, %s439, 3
        %s442 = smul.addr %s441, 8
        %s443 = scalar_lea.vmem %s0, %s442
        %p444 = pneg %p50
        %p445 = pneg %p47
        %p446 = pneg %p71
        %p447 = pneg %p68
        %p448 = pneg %p92
        %p449 = pneg %p89
        %p450 = pneg %p113
        %p451 = pneg %p110
        %p452 = pneg %p134
        %p453 = pneg %p131
        %p454 = pneg %p155
        %p455 = pneg %p152
        %p456 = pneg %p176
        %p457 = pneg %p173
        %p458 = pneg %p197
        %p459 = pneg %p194
        %p460 = pneg %p218
        %p461 = pneg %p215
        %p462 = pneg %p239
        %p463 = pneg %p236
        %p464 = pneg %p260
        %p465 = pneg %p257
        %p466 = pneg %p281
        %p467 = pneg %p278
        %p468 = pneg %p307
        %p469 = pneg %p304
        %s470 = sand.u32 %s294, 1
        %s471 = scalar_lea.sflag [#allocation4], %s470
        %s472 = sand.u32 %s294, 1
        %s473 = smul.addr %s472, 16
        %s474 = scalar_lea.vmem [#allocation11], %s473
        %s475 = smul.u32 2, %s29
        %p476 = scmp.lt.s32.totalorder %s475, 3
        %s477 = scalar_select %p476, %s475, 3
        %s478 = smul.addr %s477, 8
        %s479 = scalar_lea.vmem %s0, %s478
        %s480 = smul.u32 2, %s29
        %s481 = smul.u32 2, %s29
        %v483 = vld [vmem:[%s479] sm:$0xff]
        %v484 = vld [vmem:[%s479 + $0x8] sm:$0xff]
        %v485 = vmul.f32 %v483, %v483
        %v486 = vmul.f32 %v484, %v484
        %vm487 = vcmask 261120
        %v488 = vsel %vm487, %v485, 0.0
        %489 = vadd.xlane.f32.xlu0 %v488
        %v490 = vpop.xlane.xlu0 %489
        %v491 = vsel %vm487, %v486, 0.0
        %492 = vadd.xlane.f32.xlu0 %v491
        %v493 = vpop.xlane.xlu0 %492
        %v494 = vrcp.pop 32.0
        %v495 = vmul.f32 %v490, %v494
        %v496 = vmul.f32 %v493, %v494
        %v497 = vadd.f32 %v495, 1e-05
        %v498 = vadd.f32 %v496, 1e-05
        %v499 = vrsqrt.pop %v497
        %v500 = vrsqrt.pop %v498
        %v501 = vmul.f32 %v483, %v499
        %v502 = vmul.f32 %v484, %v500
        %v503 = vld [vmem:[#allocation2] sm:$0x1]
        %v505 = vlaneseq
        %v506 = vshrl.u32 %v505, 7
        %v507 = vsub.s32 0, %v506
        %v508 = vrot.slane %v503, %v507
        %v510 = vmul.f32 %v501, %v508
        %v511 = vmul.f32 %v502, %v508
        %v512 = vpack.c.bf16 %v511, %v510
        %v513 = vld [vmem:[#allocation5] sm:$0xf]
        %v514 = vld [vmem:[#allocation5 + $0x4] sm:$0xf]
        %v515 = vld [vmem:[#allocation5 + $0x8] sm:$0xf]
        %v516 = vld [vmem:[#allocation5 + $0xc] sm:$0xf]
        %v517 = vld [vmem:[#allocation7] sm:$0x1]
        %v519 = vlaneseq
        %v520 = vshrl.u32 %v519, 7
        %v521 = vsub.s32 0, %v520
        %v522 = vrot.slane %v517, %v521
        %v528 = vunpack.c.l.b16 %v513
        %v529 = vunpack.c.l.b16 %v514
        %v530 = vunpack.c.l.b16 %v515
        %v531 = vunpack.c.l.b16 %v516
        %v532 = vpack.c.b16 %v529, %v528
        %v533 = vpack.c.b16 %v531, %v530
        %v537 = vsel %vm487, %v512, 0
        %539 = vmatprep.subr.bf16.mxu0 0
        %540 = vmatpush1.bf16.msra.mxu0 0
        %541 = vmatprep.subr.bf16.mxu0 0
        %542 = vmatpush1.bf16.msra.mxu0 0
        %543 = vmatprep.subr.bf16.mxu0 0
        %544 = vmatpush1.bf16.msra.mxu0 0
        %545 = vmatprep.subr.bf16.mxu0 0
        %546 = vmatpush1.bf16.msra.mxu0 0
        %547 = vmatprep.subr.bf16.mxu0 0
        %548 = vmatpush1.bf16.msra.mxu0 0
        %549 = vmatprep.subr.bf16.mxu0 0
        %550 = vmatpush1.bf16.msra.mxu0 0
        %551 = vmatprep.subr.bf16.mxu0 0
        %552 = vmatpush1.bf16.msra.mxu0 %v533
        %553 = vmatprep.subr.bf16.mxu0 0
        %554 = vmatpush1.bf16.msra.mxu0 %v532
        %555 = vmatprep.subr.bf16.mxu0 0
        %556 = vmatpush2.bf16.msra.mxu0 0
        %557 = vmatprep.subr.bf16.mxu0 0
        %558 = vmatpush2.bf16.msra.mxu0 0
        %559 = vmatprep.subr.bf16.mxu0 0
        %560 = vmatpush2.bf16.msra.mxu0 0
        %561 = vmatprep.subr.bf16.mxu0 0
        %562 = vmatpush2.bf16.msra.mxu0 0
        %563 = vmatprep.subr.bf16.mxu0 0
        %564 = vmatpush2.bf16.msra.mxu0 0
        %565 = vmatprep.subr.bf16.mxu0 0
        %566 = vmatpush2.bf16.msra.mxu0 0
        %567 = vmatprep.subr.bf16.mxu0 0
        %568 = vmatpush2.bf16.msra.mxu0 0
        %569 = vmatprep.subr.bf16.mxu0 0
        %570 = vmatpush2.bf16.msra.mxu0 0
        %571 = vmatprep.mubr.bf16.mxu0 0
        %572 = vmatmul.mubr.bf16.gmra.mxu0 %v537
        %v573 = vpop.f32.mrf.mxu0
        %v574 = vadd.f32 %v522, %v573
        %v575 = vpop.f32.mrf.mxu0
        %v576 = vpop.f32.mrf.mxu0
        %v577 = vadd.f32 %v522, %v576
        %v578 = vpop.f32.mrf.mxu0
        %579 = vdwg.mxu0
        %v580 = vxor.u32 %v574, 2147483648
        %v581 = vxor.u32 %v577, 2147483648
        %v582 = vmul.f32 %v580, 1.442695
        %v583 = vpow.pop %v582
        %v584 = vmul.f32 %v581, 1.442695
        %v585 = vpow.pop %v584
        %v586 = vadd.f32 %v583, 1.0
        %v587 = vadd.f32 %v585, 1.0
        %v588 = vrcp.pop %v586
        %v589 = vmul.f32 1.0, %v588
        %v590 = vrcp.pop %v587
        %v591 = vmul.f32 1.0, %v590
        %v592 = vmul.f32 %v574, %v589
        %v593 = vmul.f32 %v577, %v591
        %v594 = vlaneseq
        %v595 = vand.u32 %v594, 127
        %vm596 = vcmp.eq.s32.totalorder %v595, 0
        %vm597 = vcmask 1048064
        %598 = vrot.lane.b32.xlu0 %v574, 64
        %v599 = vpop.permute.xlu0 %598
        %v600 = vsel %vm597, %v599, %v574
        %601 = vrot.lane.b32.xlu0 %v577, 64
        %v602 = vpop.permute.xlu0 %601
        %v603 = vsel %vm597, %v602, %v577
        %604 = vrot.lane.b32.xlu0 %v600, 64
        %v605 = vpop.permute.xlu0 %604
        %606 = vrot.lane.b32.xlu0 %v603, 64
        %v607 = vpop.permute.xlu0 %606
        %v608 = vsel %vm597, %v605, %v574
        %v609 = vsel %vm597, %v607, %v577
        %612 = vrot.lane.b32.xlu0 %v608, 65
        %v613 = vpop.permute.xlu0 %612
        %614 = vrot.lane.b32.xlu0 %v609, 65
        %v615 = vpop.permute.xlu0 %614
        %v618 = vsel %vm596, 0.0, %v613
        %v619 = vsel %vm596, 0.0, %v615
        %vm620 = vcmp.eq.s32.totalorder %v595, 63
        %621 = vrot.lane.b32.xlu0 %v608, 127
        %v622 = vpop.permute.xlu0 %621
        %623 = vrot.lane.b32.xlu0 %v609, 127
        %v624 = vpop.permute.xlu0 %623
        %v627 = vsel %vm620, 0.0, %v622
        %v628 = vsel %vm620, 0.0, %v624
        %v629 = vld [vmem:[#allocation8] sm:$0xff]
        %v630 = vld [vmem:[%s5] sm:$0xff]
        %632 = vset.pattern.permute.xlu0 0
        %633 = vperm.xlu0 %632, %v630
        %v634 = vpop.permute.xlu0 %633
        %vm636 = vcmask 195584
        %v638 = vsel %vm636, %v629, 0
        %640 = vmatprep.subr.mxu0 0.0
        %641 = vmatpush1.msra.mxu0 0.0
        %642 = vmatprep.subr.mxu0 0.0
        %643 = vmatpush1.msra.mxu0 0.0
        %644 = vmatprep.subr.mxu0 0.0
        %645 = vmatpush1.msra.mxu0 0.0
        %646 = vmatprep.subr.mxu0 0.0
        %647 = vmatpush1.msra.mxu0 0.0
        %648 = vmatprep.subr.mxu0 0.0
        %649 = vmatpush1.msra.mxu0 0.0
        %650 = vmatprep.subr.mxu0 0.0
        %651 = vmatpush1.msra.mxu0 0.0
        %652 = vmatprep.subr.mxu0 0.0
        %653 = vmatpush1.msra.mxu0 0.0
        %654 = vmatprep.subr.mxu0 0.0
        %655 = vmatpush1.msra.mxu0 0.0
        %656 = vmatprep.subr.mxu0 0.0
        %657 = vmatpush1.msra.mxu0 0.0
        %658 = vmatprep.subr.mxu0 0.0
        %659 = vmatpush1.msra.mxu0 0.0
        %660 = vmatprep.subr.mxu0 0.0
        %661 = vmatpush1.msra.mxu0 0.0
        %662 = vmatprep.subr.mxu0 0.0
        %663 = vmatpush1.msra.mxu0 0.0
        %664 = vmatprep.subr.mxu0 0.0
        %665 = vmatpush1.msra.mxu0 0.0
        %666 = vmatprep.subr.mxu0 0.0
        %667 = vmatpush1.msra.mxu0 %v627
        %668 = vmatprep.subr.mxu0 0.0
        %669 = vmatpush1.msra.mxu0 %v574
        %670 = vmatprep.subr.mxu0 0.0
        %671 = vmatpush1.msra.mxu0 %v618
        %672 = vmatprep.subr.mxu0 0.0
        %673 = vmatpush2.msra.mxu0 0.0
        %674 = vmatprep.subr.mxu0 0.0
        %675 = vmatpush2.msra.mxu0 0.0
        %676 = vmatprep.subr.mxu0 0.0
        %677 = vmatpush2.msra.mxu0 0.0
        %678 = vmatprep.subr.mxu0 0.0
        %679 = vmatpush2.msra.mxu0 0.0
        %680 = vmatprep.subr.mxu0 0.0
        %681 = vmatpush2.msra.mxu0 0.0
        %682 = vmatprep.subr.mxu0 0.0
        %683 = vmatpush2.msra.mxu0 0.0
        %684 = vmatprep.subr.mxu0 0.0
        %685 = vmatpush2.msra.mxu0 0.0
        %686 = vmatprep.subr.mxu0 0.0
        %687 = vmatpush2.msra.mxu0 0.0
        %688 = vmatprep.subr.mxu0 0.0
        %689 = vmatpush2.msra.mxu0 0.0
        %690 = vmatprep.subr.mxu0 0.0
        %691 = vmatpush2.msra.mxu0 0.0
        %692 = vmatprep.subr.mxu0 0.0
        %693 = vmatpush2.msra.mxu0 0.0
        %694 = vmatprep.subr.mxu0 0.0
        %695 = vmatpush2.msra.mxu0 0.0
        %696 = vmatprep.subr.mxu0 0.0
        %697 = vmatpush2.msra.mxu0 0.0
        %698 = vmatprep.subr.mxu0 0.0
        %699 = vmatpush2.msra.mxu0 0.0
        %700 = vmatprep.subr.mxu0 0.0
        %701 = vmatpush2.msra.mxu0 0.0
        %702 = vmatprep.subr.mxu0 0.0
        %703 = vmatpush2.msra.mxu0 0.0
        %704 = vmatprep.mubr.f32.mxu0 0.0
        %705 = vmatmul.mubr.f32.gmra.mxu0 %v638
        %v706 = vpop.f32.mrf.mxu0
        %v707 = vadd.f32 %v634, %v706
        %v708 = vpop.f32.mrf.mxu0
        %709 = vdwg.mxu0
        %710 = vmatprep.subr.mxu0 0.0
        %711 = vmatpush1.msra.mxu0 0.0
        %712 = vmatprep.subr.mxu0 0.0
        %713 = vmatpush1.msra.mxu0 0.0
        %714 = vmatprep.subr.mxu0 0.0
        %715 = vmatpush1.msra.mxu0 0.0
        %716 = vmatprep.subr.mxu0 0.0
        %717 = vmatpush1.msra.mxu0 0.0
        %718 = vmatprep.subr.mxu0 0.0
        %719 = vmatpush1.msra.mxu0 0.0
        %720 = vmatprep.subr.mxu0 0.0
        %721 = vmatpush1.msra.mxu0 0.0
        %722 = vmatprep.subr.mxu0 0.0
        %723 = vmatpush1.msra.mxu0 0.0
        %724 = vmatprep.subr.mxu0 0.0
        %725 = vmatpush1.msra.mxu0 0.0
        %726 = vmatprep.subr.mxu0 0.0
        %727 = vmatpush1.msra.mxu0 0.0
        %728 = vmatprep.subr.mxu0 0.0
        %729 = vmatpush1.msra.mxu0 0.0
        %730 = vmatprep.subr.mxu0 0.0
        %731 = vmatpush1.msra.mxu0 0.0
        %732 = vmatprep.subr.mxu0 0.0
        %733 = vmatpush1.msra.mxu0 0.0
        %734 = vmatprep.subr.mxu0 0.0
        %735 = vmatpush1.msra.mxu0 0.0
        %736 = vmatprep.subr.mxu0 0.0
        %737 = vmatpush1.msra.mxu0 %v628
        %738 = vmatprep.subr.mxu0 0.0
        %739 = vmatpush1.msra.mxu0 %v577
        %740 = vmatprep.subr.mxu0 0.0
        %741 = vmatpush1.msra.mxu0 %v619
        %742 = vmatprep.subr.mxu0 0.0
        %743 = vmatpush2.msra.mxu0 0.0
        %744 = vmatprep.subr.mxu0 0.0
        %745 = vmatpush2.msra.mxu0 0.0
        %746 = vmatprep.subr.mxu0 0.0
        %747 = vmatpush2.msra.mxu0 0.0
        %748 = vmatprep.subr.mxu0 0.0
        %749 = vmatpush2.msra.mxu0 0.0
        %750 = vmatprep.subr.mxu0 0.0
        %751 = vmatpush2.msra.mxu0 0.0
        %752 = vmatprep.subr.mxu0 0.0
        %753 = vmatpush2.msra.mxu0 0.0
        %754 = vmatprep.subr.mxu0 0.0
        %755 = vmatpush2.msra.mxu0 0.0
        %756 = vmatprep.subr.mxu0 0.0
        %757 = vmatpush2.msra.mxu0 0.0
        %758 = vmatprep.subr.mxu0 0.0
        %759 = vmatpush2.msra.mxu0 0.0
        %760 = vmatprep.subr.mxu0 0.0
        %761 = vmatpush2.msra.mxu0 0.0
        %762 = vmatprep.subr.mxu0 0.0
        %763 = vmatpush2.msra.mxu0 0.0
        %764 = vmatprep.subr.mxu0 0.0
        %765 = vmatpush2.msra.mxu0 0.0
        %766 = vmatprep.subr.mxu0 0.0
        %767 = vmatpush2.msra.mxu0 0.0
        %768 = vmatprep.subr.mxu0 0.0
        %769 = vmatpush2.msra.mxu0 0.0
        %770 = vmatprep.subr.mxu0 0.0
        %771 = vmatpush2.msra.mxu0 0.0
        %772 = vmatprep.subr.mxu0 0.0
        %773 = vmatpush2.msra.mxu0 0.0
        %774 = vmatprep.mubr.f32.mxu0 0.0
        %775 = vmatmul.mubr.f32.gmra.mxu0 %v638
        %v776 = vpop.f32.mrf.mxu0
        %v777 = vadd.f32 %v634, %v776
        %v778 = vpop.f32.mrf.mxu0
        %779 = vdwg.mxu0
        %v780 = vxor.u32 %v707, 2147483648
        %v781 = vxor.u32 %v777, 2147483648
        %v782 = vmul.f32 %v780, 1.442695
        %v783 = vpow.pop %v782
        %v784 = vmul.f32 %v781, 1.442695
        %v785 = vpow.pop %v784
        %v786 = vadd.f32 %v783, 1.0
        %v787 = vadd.f32 %v785, 1.0
        %v788 = vrcp.pop %v786
        %v789 = vmul.f32 1.0, %v788
        %v790 = vrcp.pop %v787
        %v791 = vmul.f32 1.0, %v790
        %v792 = vmul.f32 %v707, %v789
        %v793 = vmul.f32 %v777, %v791
        %v794 = vpack.c.bf16 %v793, %v792
        %v795 = vld [vmem:[%s6] sm:$0xf]
        %v796 = vld [vmem:[%s6 + $0x4] sm:$0xf]
        %v797 = vld [vmem:[%s6 + $0x8] sm:$0xf]
        %v798 = vld [vmem:[%s6 + $0xc] sm:$0xf]
        %v799 = vld [vmem:[%s6 + $0x10] sm:$0xf]
        %v800 = vld [vmem:[%s6 + $0x14] sm:$0xf]
        %v801 = vld [vmem:[%s6 + $0x18] sm:$0xf]
        %v802 = vld [vmem:[%s6 + $0x1c] sm:$0xf]
        %v803 = vld [vmem:[%s7] sm:$0x1]
        %v805 = vlaneseq
        %v806 = vshrl.u32 %v805, 7
        %v807 = vsub.s32 0, %v806
        %v808 = vrot.slane %v803, %v807
        %v818 = vunpack.c.l.b16 %v795
        %v819 = vunpack.c.l.b16 %v796
        %v820 = vunpack.c.l.b16 %v797
        %v821 = vunpack.c.l.b16 %v798
        %v822 = vunpack.c.l.b16 %v799
        %v823 = vunpack.c.l.b16 %v800
        %v824 = vunpack.c.l.b16 %v801
        %v825 = vunpack.c.l.b16 %v802
        %v826 = vpack.c.b16 %v819, %v818
        %v827 = vpack.c.b16 %v821, %v820
        %v828 = vpack.c.b16 %v823, %v822
        %v829 = vpack.c.b16 %v825, %v824
        %vm834 = vcmask 523264
        %v836 = vsel %vm834, %v794, 0
        %838 = vmatprep.subr.bf16.mxu0 0
        %839 = vmatpush1.bf16.msra.mxu0 0
        %840 = vmatprep.subr.bf16.mxu0 0
        %841 = vmatpush1.bf16.msra.mxu0 0
        %842 = vmatprep.subr.bf16.mxu0 0
        %843 = vmatpush1.bf16.msra.mxu0 0
        %844 = vmatprep.subr.bf16.mxu0 0
        %845 = vmatpush1.bf16.msra.mxu0 0
        %846 = vmatprep.subr.bf16.mxu0 0
        %847 = vmatpush1.bf16.msra.mxu0 %v829
        %848 = vmatprep.subr.bf16.mxu0 0
        %849 = vmatpush1.bf16.msra.mxu0 %v828
        %850 = vmatprep.subr.bf16.mxu0 0
        %851 = vmatpush1.bf16.msra.mxu0 %v827
        %852 = vmatprep.subr.bf16.mxu0 0
        %853 = vmatpush1.bf16.msra.mxu0 %v826
        %854 = vmatprep.subr.bf16.mxu0 0
        %855 = vmatpush2.bf16.msra.mxu0 0
        %856 = vmatprep.subr.bf16.mxu0 0
        %857 = vmatpush2.bf16.msra.mxu0 0
        %858 = vmatprep.subr.bf16.mxu0 0
        %859 = vmatpush2.bf16.msra.mxu0 0
        %860 = vmatprep.subr.bf16.mxu0 0
        %861 = vmatpush2.bf16.msra.mxu0 0
        %862 = vmatprep.subr.bf16.mxu0 0
        %863 = vmatpush2.bf16.msra.mxu0 0
        %864 = vmatprep.subr.bf16.mxu0 0
        %865 = vmatpush2.bf16.msra.mxu0 0
        %866 = vmatprep.subr.bf16.mxu0 0
        %867 = vmatpush2.bf16.msra.mxu0 0
        %868 = vmatprep.subr.bf16.mxu0 0
        %869 = vmatpush2.bf16.msra.mxu0 0
        %870 = vmatprep.mubr.bf16.mxu0 0
        %871 = vmatmul.mubr.bf16.gmra.mxu0 %v836
        %v872 = vpop.f32.mrf.mxu0
        %v873 = vadd.f32 %v808, %v872
        %v874 = vpop.f32.mrf.mxu0
        %v875 = vpop.f32.mrf.mxu0
        %v876 = vadd.f32 %v808, %v875
        %v877 = vpop.f32.mrf.mxu0
        %878 = vdwg.mxu0
        %v879 = vpack.c.bf16 %v876, %v873
        %v880 = vld [vmem:[#allocation10] sm:$0xf]
        %v881 = vld [vmem:[#allocation10 + $0x4] sm:$0xf]
        %v882 = vld [vmem:[#allocation10 + $0x8] sm:$0xf]
        %v883 = vld [vmem:[#allocation10 + $0xc] sm:$0xf]
        %v884 = vld [vmem:[#allocation10 + $0x10] sm:$0xf]
        %v885 = vld [vmem:[#allocation10 + $0x14] sm:$0xf]
        %v886 = vld [vmem:[#allocation10 + $0x18] sm:$0xf]
        %v887 = vld [vmem:[#allocation10 + $0x1c] sm:$0xf]
        %v888 = vld [vmem:[%s9] sm:$0x1]
        %v890 = vlaneseq
        %v891 = vshrl.u32 %v890, 7
        %v892 = vsub.s32 0, %v891
        %v893 = vrot.slane %v888, %v892
        %v903 = vunpack.c.l.b16 %v880
        %v904 = vunpack.c.l.b16 %v881
        %v905 = vunpack.c.l.b16 %v882
        %v906 = vunpack.c.l.b16 %v883
        %v907 = vunpack.c.l.b16 %v884
        %v908 = vunpack.c.l.b16 %v885
        %v909 = vunpack.c.l.b16 %v886
        %v910 = vunpack.c.l.b16 %v887
        %v911 = vpack.c.b16 %v904, %v903
        %v912 = vpack.c.b16 %v906, %v905
        %v913 = vpack.c.b16 %v908, %v907
        %v914 = vpack.c.b16 %v910, %v909
        %v920 = vsel %vm834, %v879, 0
        %922 = vmatprep.subr.bf16.mxu0 0
        %923 = vmatpush1.bf16.msra.mxu0 0
        %924 = vmatprep.subr.bf16.mxu0 0
        %925 = vmatpush1.bf16.msra.mxu0 0
        %926 = vmatprep.subr.bf16.mxu0 0
        %927 = vmatpush1.bf16.msra.mxu0 0
        %928 = vmatprep.subr.bf16.mxu0 0
        %929 = vmatpush1.bf16.msra.mxu0 0
        %930 = vmatprep.subr.bf16.mxu0 0
        %931 = vmatpush1.bf16.msra.mxu0 %v914
        %932 = vmatprep.subr.bf16.mxu0 0
        %933 = vmatpush1.bf16.msra.mxu0 %v913
        %934 = vmatprep.subr.bf16.mxu0 0
        %935 = vmatpush1.bf16.msra.mxu0 %v912
        %936 = vmatprep.subr.bf16.mxu0 0
        %937 = vmatpush1.bf16.msra.mxu0 %v911
        %938 = vmatprep.subr.bf16.mxu0 0
        %939 = vmatpush2.bf16.msra.mxu0 0
        %940 = vmatprep.subr.bf16.mxu0 0
        %941 = vmatpush2.bf16.msra.mxu0 0
        %942 = vmatprep.subr.bf16.mxu0 0
        %943 = vmatpush2.bf16.msra.mxu0 0
        %944 = vmatprep.subr.bf16.mxu0 0
        %945 = vmatpush2.bf16.msra.mxu0 0
        %946 = vmatprep.subr.bf16.mxu0 0
        %947 = vmatpush2.bf16.msra.mxu0 0
        %948 = vmatprep.subr.bf16.mxu0 0
        %949 = vmatpush2.bf16.msra.mxu0 0
        %950 = vmatprep.subr.bf16.mxu0 0
        %951 = vmatpush2.bf16.msra.mxu0 0
        %952 = vmatprep.subr.bf16.mxu0 0
        %953 = vmatpush2.bf16.msra.mxu0 0
        %954 = vmatprep.mubr.bf16.mxu0 0
        %955 = vmatmul.mubr.bf16.gmra.mxu0 %v920
        %v956 = vpop.f32.mrf.mxu0
        %v957 = vadd.f32 %v893, %v956
        %v958 = vpop.f32.mrf.mxu0
        %v959 = vpop.f32.mrf.mxu0
        %v960 = vadd.f32 %v893, %v959
        %v961 = vpop.f32.mrf.mxu0
        %962 = vdwg.mxu0
        %vm963 = vcmp.gt.f32.partialorder %v957, 20.0
        %vm964 = vcmp.gt.f32.partialorder %v960, 20.0
        %v965 = vmin.f32 %v957, 20.0
        %v966 = vmin.f32 %v960, 20.0
        %v967 = vmul.f32 %v965, 1.442695
        %v968 = vpow.pop %v967
        %v969 = vmul.f32 %v966, 1.442695
        %v970 = vpow.pop %v969
        %v971 = vadd.f32 %v968, 1.0
        %v972 = vlog2.pop %v971
        %v973 = vmul.f32 %v972, 0.6931472
        %v974 = vmul.f32 -0.5, %v968
        %v975 = vadd.f32 %v974, 1.0
        %v976 = vmul.f32 %v975, %v968
        %v977 = vand.u32 2147483647, %v968
        %vm978 = vcmp.lt.f32.partialorder %v977, 0.0004427343
        %v979 = vsel %vm978, %v976, %v973
        %v980 = vadd.f32 %v970, 1.0
        %v981 = vlog2.pop %v980
        %v982 = vmul.f32 %v981, 0.6931472
        %v983 = vmul.f32 -0.5, %v970
        %v984 = vadd.f32 %v983, 1.0
        %v985 = vmul.f32 %v984, %v970
        %v986 = vand.u32 2147483647, %v970
        %vm987 = vcmp.lt.f32.partialorder %v986, 0.0004427343
        %v988 = vsel %vm987, %v985, %v982
        %v989 = vsel %vm963, %v957, %v979
        %v990 = vsel %vm964, %v960, %v988
        %993 = vrot.lane.b32.xlu0 %v957, 112
        %v994 = vpop.permute.xlu0 %993
        %995 = vrot.lane.b32.xlu0 %v960, 112
        %v996 = vpop.permute.xlu0 %995
        %v999 = vmul.f32 %v957, %v994
        %v1000 = vmul.f32 %v960, %v996
        %1003 = vrot.lane.b32.xlu0 %v999, 64
        %v1004 = vpop.permute.xlu0 %1003
        %1005 = vrot.lane.b32.xlu0 %v1000, 64
        %v1006 = vpop.permute.xlu0 %1005
        %vm1009 = vcmask 130048
        %v1010 = vsel %vm1009, %v1004, 0.0
        %1011 = vadd.xlane.f32.xlu0 %v1010
        %v1012 = vpop.xlane.xlu0 %1011
        %v1013 = vsel %vm1009, %v1006, 0.0
        %1014 = vadd.xlane.f32.xlu0 %v1013
        %v1015 = vpop.xlane.xlu0 %1014
        %v1016 = vmul.f32 %v873, %v989
        %v1017 = vmul.f32 %v876, %v990
        %v1018 = vmul.f32 %v1016, %v1012
        %v1019 = vmul.f32 %v1017, %v1015
        %v1020 = vxor.u32 %v1018, 2147483648
        %v1021 = vxor.u32 %v1019, 2147483648
        %v1022 = vmul.f32 %v1020, 1.442695
        %v1023 = vpow.pop %v1022
        %v1024 = vmul.f32 %v1021, 1.442695
        %v1025 = vpow.pop %v1024
        %v1026 = vadd.f32 %v1023, 1.0
        %v1027 = vadd.f32 %v1025, 1.0
        %v1028 = vrcp.pop %v1026
        %v1029 = vmul.f32 1.0, %v1028
        %v1030 = vrcp.pop %v1027
        %v1031 = vmul.f32 1.0, %v1030
        %v1032 = vmul.f32 %v1018, %v1029
        %v1033 = vmul.f32 %v1019, %v1031
        %1036 = vrot.lane.b32.xlu0 %v592, 64
        %v1037 = vpop.permute.xlu0 %1036
        %1038 = vrot.lane.b32.xlu0 %v593, 64
        %v1039 = vpop.permute.xlu0 %1038
        %v1042 = vmul.f32 %v1032, %v1037
        %v1043 = vmul.f32 %v1033, %v1039
        %v1044 = vpack.c.bf16 %v1043, %v1042
        %v1045 = vld [vmem:[%s10] sm:$0xf]
        %v1046 = vld [vmem:[%s10 + $0x4] sm:$0xf]
        %v1047 = vld [vmem:[%s10 + $0x8] sm:$0xf]
        %v1048 = vld [vmem:[%s10 + $0xc] sm:$0xf]
        %v1049 = vld [vmem:[%s10 + $0x10] sm:$0xf]
        %v1050 = vld [vmem:[%s10 + $0x14] sm:$0xf]
        %v1051 = vld [vmem:[%s10 + $0x18] sm:$0xf]
        %v1052 = vld [vmem:[%s10 + $0x1c] sm:$0xf]
        %v1053 = vld [vmem:[%s11] sm:$0x1]
        %v1055 = vlaneseq
        %v1056 = vshrl.u32 %v1055, 7
        %v1057 = vsub.s32 0, %v1056
        %v1058 = vrot.slane %v1053, %v1057
        %v1068 = vunpack.c.l.b16 %v1045
        %v1069 = vunpack.c.l.b16 %v1046
        %v1070 = vunpack.c.l.b16 %v1047
        %v1071 = vunpack.c.l.b16 %v1048
        %v1072 = vunpack.c.l.b16 %v1049
        %v1073 = vunpack.c.l.b16 %v1050
        %v1074 = vunpack.c.l.b16 %v1051
        %v1075 = vunpack.c.l.b16 %v1052
        %v1076 = vpack.c.b16 %v1069, %v1068
        %v1077 = vpack.c.b16 %v1071, %v1070
        %v1078 = vpack.c.b16 %v1073, %v1072
        %v1079 = vpack.c.b16 %v1075, %v1074
        %v1085 = vsel %vm834, %v1044, 0
        %1087 = vmatprep.subr.bf16.mxu0 0
        %1088 = vmatpush1.bf16.msra.mxu0 0
        %1089 = vmatprep.subr.bf16.mxu0 0
        %1090 = vmatpush1.bf16.msra.mxu0 0
        %1091 = vmatprep.subr.bf16.mxu0 0
        %1092 = vmatpush1.bf16.msra.mxu0 0
        %1093 = vmatprep.subr.bf16.mxu0 0
        %1094 = vmatpush1.bf16.msra.mxu0 0
        %1095 = vmatprep.subr.bf16.mxu0 0
        %1096 = vmatpush1.bf16.msra.mxu0 %v1079
        %1097 = vmatprep.subr.bf16.mxu0 0
        %1098 = vmatpush1.bf16.msra.mxu0 %v1078
        %1099 = vmatprep.subr.bf16.mxu0 0
        %1100 = vmatpush1.bf16.msra.mxu0 %v1077
        %1101 = vmatprep.subr.bf16.mxu0 0
        %1102 = vmatpush1.bf16.msra.mxu0 %v1076
        %1103 = vmatprep.subr.bf16.mxu0 0
        %1104 = vmatpush2.bf16.msra.mxu0 0
        %1105 = vmatprep.subr.bf16.mxu0 0
        %1106 = vmatpush2.bf16.msra.mxu0 0
        %1107 = vmatprep.subr.bf16.mxu0 0
        %1108 = vmatpush2.bf16.msra.mxu0 0
        %1109 = vmatprep.subr.bf16.mxu0 0
        %1110 = vmatpush2.bf16.msra.mxu0 0
        %1111 = vmatprep.subr.bf16.mxu0 0
        %1112 = vmatpush2.bf16.msra.mxu0 0
        %1113 = vmatprep.subr.bf16.mxu0 0
        %1114 = vmatpush2.bf16.msra.mxu0 0
        %1115 = vmatprep.subr.bf16.mxu0 0
        %1116 = vmatpush2.bf16.msra.mxu0 0
        %1117 = vmatprep.subr.bf16.mxu0 0
        %1118 = vmatpush2.bf16.msra.mxu0 0
        %1119 = vmatprep.mubr.bf16.mxu0 0
        %1120 = vmatmul.mubr.bf16.gmra.mxu0 %v1085
        %v1121 = vpop.f32.mrf.mxu0
        %v1122 = vadd.f32 %v1058, %v1121
        %v1123 = vpop.f32.mrf.mxu0
        %v1124 = vpop.f32.mrf.mxu0
        %v1125 = vadd.f32 %v1058, %v1124
        %v1126 = vpop.f32.mrf.mxu0
        %1127 = vdwg.mxu0
        %1128 = vst.msk [vmem:[%s474] sm:$0xff] %vm487, %v1122
        %1129 = vst.msk [vmem:[%s474 + $0x8] sm:$0xff] %vm487, %v1125
        %s1130 = sand.u32 %s294, 1
        %s1131 = scalar_lea.sflag [#allocation4], %s1130
        %s1132 = sand.u32 %s294, 1
        %s1133 = smul.addr %s1132, 16
        %s1134 = scalar_lea.vmem [#allocation11], %s1133
        // Predicated region
        $region89: #{fwd.1} parent=67 // pred_check
          %p1135 = pneg %p304
        $region90: #{fwd.1} parent=67 // pred_check_branch
          %1137 = sbr.rel (%p1135) target = $region92
        $region91: #{fwd.1} parent=67 // pred_region
          %s1138 = smul.u32 2, %s29
          %s1140 = ssub.s32 256, 256
          %1141 = vsyncadd %s1131, %s1140
          %s1142 = smul.addr %s1138, 128
          %s1143 = scalar_lea.hbm %s12, %s1142
          %s1144 = sshll.u32 %s1134, 4
          %s1145 = int_to_ptr.vmem [resolvable:$true] %s1144
          %1150 = dma.vmem_to_hbm [thread:$0]  %s1145, 256, %s1143, %s1131, 128, 128, 8
        $region92: #{fwd.1} parent=67 // pred_fallthru
          _
      $region68: #{fwd.1} parent=5 // pred_fallthru
        _
      %p1151 = scmp.le.s32.totalorder 2, %s24
      // Predicated region
      $region93: #{fwd.1} parent=5 // pred_check
        %p1152 = pneg %p1151
      $region94: #{fwd.1} parent=5 // pred_check_branch
        %1154 = sbr.rel (%p1152) target = $region96
      $region95: #{fwd.1} parent=5 // pred_region
        %s1155 = ssub.s32 %s24, 2
        // Predicated region
        $region97: #{fwd.1} parent=95 // pred_check
          %p1156 = pneg %p310
        $region98: #{fwd.1} parent=95 // pred_check_branch
          %1158 = sbr.rel (%p1156) target = $region100
        $region99: #{fwd.1} parent=95 // pred_region
          %s1159 = sand.u32 %s295, 1
          %s1160 = scalar_lea.sflag [#allocation4], %s1159
          %s1161 = sand.u32 %s295, 1
          %s1162 = smul.addr %s1161, 16
          %s1163 = scalar_lea.vmem [#allocation11], %s1162
          %1164 = dma.done %s1160, 256
        $region100: #{fwd.1} parent=95 // pred_fallthru
          _
      $region96: #{fwd.1} parent=5 // pred_fallthru
        _
    $region6: #{fwd.1} parent=1 // loop_footer
      %s28 = sadd.s32 1, %s24
    $region7: #{fwd.1} parent=1 // loop_footer_branch
      %23 = sbr.rel target = $region3
    $region8: #{fwd.1} parent=1 // loop_exit
      _
    %1165 = vsyncpa [#allocation3], 1
    %s1166 = scalar_lea.sflag [#allocation3], 1
    %1167 = vsyncpa %s1166, 1
    %1168 = vsyncpa [#allocation6], 1
    %1169 = vsyncpa [#allocation9], 1
    %1170 = vsyncpa [#allocation4], 1
    %s1171 = scalar_lea.sflag [#allocation4], 1
    %1172 = vsyncpa %s1171, 1

// kernel: fwd.1
$region0: #{fwd.1}
  #allocation0 [shape = 'u32[]', space=smem, size = 0x4, offset = 0x4, fixed_abs, tag = 'smem constant byte address 0x4 - core index']
  #allocation1 [shape = 'u32[144,128]{1,0:T(1,128)}', space=vmem, size = 0x12000, scoped, tag = 'internal scratch']
  %s0 = inlined_call_operand.vmem [shape: f32[32,32], index: 0, kind: input, shape index: {}]
  %s1 = inlined_call_operand.hbm [shape: f32[1,32], index: 1, kind: input, shape index: {}]
  %s2 = inlined_call_operand.hbm [shape: bf16[32,128], index: 2, kind: input, shape index: {}]
  %s3 = inlined_call_operand.hbm [shape: f32[1,128], index: 3, kind: input, shape index: {}]
  %s4 = inlined_call_operand.hbm [shape: f32[8,24], index: 4, kind: input, shape index: {}]
  %s5 = inlined_call_operand.vmem [shape: f32[8,1], index: 5, kind: input, shape index: {}]
  %s6 = inlined_call_operand.vmem [shape: bf16[64,64], index: 6, kind: input, shape index: {}]
  %s7 = inlined_call_operand.vmem [shape: f32[1,64], index: 7, kind: input, shape index: {}]
  %s8 = inlined_call_operand.hbm [shape: bf16[64,96], index: 8, kind: input, shape index: {}]
  %s9 = inlined_call_operand.vmem [shape: f32[1,96], index: 9, kind: input, shape index: {}]
  %s10 = inlined_call_operand.vmem [shape: bf16[64,32], index: 10, kind: input, shape index: {}]
  %s11 = inlined_call_operand.vmem [shape: f32[1,32], index: 11, kind: input, shape index: {}]
  %s12 = inlined_call_operand.hbm [shape: f32[32,32], index: 12, kind: output, shape index: {}]
  %s13 = sld [smem:[#allocation0]]
  $region101: #{fwd.1} parent=0
    _
  %s15 = ssub.s32 1, %s13
  %s16 = scalar_select 0, %s15, %s13
  $region1: #{fwd.1} parent=0
    #allocation2 [shape = 'u8[512]{0}', space=vmem, size = 0x400, scoped, tag = 'input window, operand 1, single buffered']
    #allocation3 [shape = 's32[2]{0}', space=sflag, size = 0x8, scoped, tag = 'scoped memory for fwd.1']
    #allocation4 [shape = 's32[2]{0}', space=sflag, size = 0x8, scoped, tag = 'scoped memory for fwd.1']
    #allocation5 [shape = 'u8[8192]{0}', space=vmem, size = 0x2000, scoped, tag = 'input window, operand 2, single buffered']
    #allocation6 [shape = 's32[1]{0}', space=sflag, size = 0x4, scoped, tag = 'scoped memory for fwd.1']
    #allocation7 [shape = 'u8[512]{0}', space=vmem, size = 0x400, scoped, tag = 'input window, operand 3, single buffered']
    #allocation8 [shape = 'u8[4096]{0}', space=vmem, size = 0x1000, scoped, tag = 'input window, operand 4, single buffered']
    #allocation9 [shape = 's32[1]{0}', space=sflag, size = 0x4, scoped, tag = 'scoped memory for fwd.1']
    #allocation10 [shape = 'u8[16384]{0}', space=vmem, size = 0x4000, scoped, tag = 'input window, operand 8, single buffered']
    #allocation11 [shape = 'u8[16384]{0}', space=vmem, size = 0x4000, scoped, tag = 'output window, operand 0']
    %17 = vsyncpa [#allocation3], 0
    %18 = vsyncpa [#allocation6], 0
    %19 = vsyncpa [#allocation9], 0
    %20 = vsyncpa [#allocation4], 0
    %s21 = scalar_lea.sflag [#allocation4], 1
    %22 = vsyncpa %s21, 0
    loop: start=0, step=1, limit=4
    $region2: #{fwd.1} parent=1 // loop_pre_header
      _
    $region3: #{fwd.1} parent=1 // loop_header
      %s24 = sphi 0, %s28
      %p25 = scmp.ge.s32.totalorder %s24, 4
      %s34 = sphi 0, %s36
      %s37 = sphi 0, %s34
      %s38 = sphi 0, %s37
      %s54 = sphi 0, %s38
      %s58 = sphi 0, %s58
      %s60 = sphi 0, %s58
      %s61 = sphi 0, %s60
      %s75 = sphi 0, %s61
      %s79 = sphi 0, %s79
      %s81 = sphi 0, %s79
      %s82 = sphi 0, %s81
      %s96 = sphi 0, %s82
      %s100 = sphi 0, %s100
      %s102 = sphi 0, %s100
      %s103 = sphi 0, %s102
      %s117 = sphi 0, %s103
      %s121 = sphi 0, %s121
      %s123 = sphi 0, %s121
      %s124 = sphi 0, %s123
      %s138 = sphi 0, %s124
      %s142 = sphi 0, %s142
      %s144 = sphi 0, %s142
      %s145 = sphi 0, %s144
      %s159 = sphi 0, %s145
      %s163 = sphi 0, %s163
      %s165 = sphi 0, %s163
      %s166 = sphi 0, %s165
      %s180 = sphi 0, %s166
      %s184 = sphi 0, %s184
      %s186 = sphi 0, %s184
      %s187 = sphi 0, %s186
      %s201 = sphi 0, %s187
      %s205 = sphi 0, %s205
      %s207 = sphi 0, %s205
      %s208 = sphi 0, %s207
      %s222 = sphi 0, %s208
      %s226 = sphi 0, %s226
      %s228 = sphi 0, %s226
      %s229 = sphi 0, %s228
      %s243 = sphi 0, %s229
      %s247 = sphi 0, %s247
      %s249 = sphi 0, %s247
      %s250 = sphi 0, %s249
      %s264 = sphi 0, %s250
      %s268 = sphi 0, %s268
      %s270 = sphi 0, %s268
      %s271 = sphi 0, %s270
      %s285 = sphi 0, %s271
      %s291 = sphi 0, %s293
      %s294 = sphi 0, %s291
      %s295 = sphi 0, %s294
      %s311 = sphi 0, %s295
    $region4: #{fwd.1} parent=1 // loop_header_branch
      %27 = sbr.rel (%p25) target = $region8
    $region5: #{fwd.1} parent=1 // loop_body
      %s29 = ssub.s32 %s24, 1
      %s30 = ssub.s32 %s24, 2
      %s31 = sadd.s32 %s24, 1
      %s32 = ssub.s32 %s24, %s31
      %p33 = scmp.eq.s32.totalorder %s32, 0
      %s35 = sadd.s32 %s34, 1
      %s36 = scalar_select %p33, %s34, %s35
      %p39 = pneg %p33
      %p40 = scmp.eq.s32.totalorder %s24, 1
      %p41 = por %p39, %p40
      %p42 = scmp.ne.s32.totalorder %s34, %s37
      %p43 = scmp.eq.s32.totalorder %s24, 0
      %p44 = por %p42, %p43
      %p45 = scmp.ne.s32.totalorder %s34, %s37
      %p46 = scmp.eq.s32.totalorder %s29, 1
      %p47 = por %p45, %p46
      %p48 = scmp.ne.s32.totalorder %s37, %s38
      %p49 = scmp.eq.s32.totalorder %s29, 0
      %p50 = por %p48, %p49
      %p51 = scmp.ne.s32.totalorder %s37, %s38
      %p52 = scmp.eq.s32.totalorder %s30, 1
      %p53 = por %p51, %p52
      %p55 = scmp.ne.s32.totalorder %s38, %s54
      %p56 = scmp.eq.s32.totalorder %s30, 0
      %p57 = por %p55, %p56
      %s59 = sadd.s32 %s58, 1
      %p62 = scmp.eq.s32.totalorder %s24, 1
      %p63 = scmp.ne.s32.totalorder %s58, %s60
      %p64 = scmp.eq.s32.totalorder %s24, 0
      %p65 = por %p63, %p64
      %p66 = scmp.ne.s32.totalorder %s58, %s60
      %p67 = scmp.eq.s32.totalorder %s29, 1
      %p68 = por %p66, %p67
      %p69 = scmp.ne.s32.totalorder %s60, %s61
      %p70 = scmp.eq.s32.totalorder %s29, 0
      %p71 = por %p69, %p70
      %p72 = scmp.ne.s32.totalorder %s60, %s61
      %p73 = scmp.eq.s32.totalorder %s30, 1
      %p74 = por %p72, %p73
      %p76 = scmp.ne.s32.totalorder %s61, %s75
      %p77 = scmp.eq.s32.totalorder %s30, 0
      %p78 = por %p76, %p77
      %s80 = sadd.s32 %s79, 1
      %p83 = scmp.eq.s32.totalorder %s24, 1
      %p84 = scmp.ne.s32.totalorder %s79, %s81
      %p85 = scmp.eq.s32.totalorder %s24, 0
      %p86 = por %p84, %p85
      %p87 = scmp.ne.s32.totalorder %s79, %s81
      %p88 = scmp.eq.s32.totalorder %s29, 1
      %p89 = por %p87, %p88
      %p90 = scmp.ne.s32.totalorder %s81, %s82
      %p91 = scmp.eq.s32.totalorder %s29, 0
      %p92 = por %p90, %p91
      %p93 = scmp.ne.s32.totalorder %s81, %s82
      %p94 = scmp.eq.s32.totalorder %s30, 1
      %p95 = por %p93, %p94
      %p97 = scmp.ne.s32.totalorder %s82, %s96
      %p98 = scmp.eq.s32.totalorder %s30, 0
      %p99 = por %p97, %p98
      %s101 = sadd.s32 %s100, 1
      %p104 = scmp.eq.s32.totalorder %s24, 1
      %p105 = scmp.ne.s32.totalorder %s100, %s102
      %p106 = scmp.eq.s32.totalorder %s24, 0
      %p107 = por %p105, %p106
      %p108 = scmp.ne.s32.totalorder %s100, %s102
      %p109 = scmp.eq.s32.totalorder %s29, 1
      %p110 = por %p108, %p109
      %p111 = scmp.ne.s32.totalorder %s102, %s103
      %p112 = scmp.eq.s32.totalorder %s29, 0
      %p113 = por %p111, %p112
      %p114 = scmp.ne.s32.totalorder %s102, %s103
      %p115 = scmp.eq.s32.totalorder %s30, 1
      %p116 = por %p114, %p115
      %p118 = scmp.ne.s32.totalorder %s103, %s117
      %p119 = scmp.eq.s32.totalorder %s30, 0
      %p120 = por %p118, %p119
      %s122 = sadd.s32 %s121, 1
      %p125 = scmp.eq.s32.totalorder %s24, 1
      %p126 = scmp.ne.s32.totalorder %s121, %s123
      %p127 = scmp.eq.s32.totalorder %s24, 0
      %p128 = por %p126, %p127
      %p129 = scmp.ne.s32.totalorder %s121, %s123
      %p130 = scmp.eq.s32.totalorder %s29, 1
      %p131 = por %p129, %p130
      %p132 = scmp.ne.s32.totalorder %s123, %s124
      %p133 = scmp.eq.s32.totalorder %s29, 0
      %p134 = por %p132, %p133
      %p135 = scmp.ne.s32.totalorder %s123, %s124
      %p136 = scmp.eq.s32.totalorder %s30, 1
      %p137 = por %p135, %p136
      %p139 = scmp.ne.s32.totalorder %s124, %s138
      %p140 = scmp.eq.s32.totalorder %s30, 0
      %p141 = por %p139, %p140
      %s143 = sadd.s32 %s142, 1
      %p146 = scmp.eq.s32.totalorder %s24, 1
      %p147 = scmp.ne.s32.totalorder %s142, %s144
      %p148 = scmp.eq.s32.totalorder %s24, 0
      %p149 = por %p147, %p148
      %p150 = scmp.ne.s32.totalorder %s142, %s144
      %p151 = scmp.eq.s32.totalorder %s29, 1
      %p152 = por %p150, %p151
      %p153 = scmp.ne.s32.totalorder %s144, %s145
      %p154 = scmp.eq.s32.totalorder %s29, 0
      %p155 = por %p153, %p154
      %p156 = scmp.ne.s32.totalorder %s144, %s145
      %p157 = scmp.eq.s32.totalorder %s30, 1
      %p158 = por %p156, %p157
      %p160 = scmp.ne.s32.totalorder %s145, %s159
      %p161 = scmp.eq.s32.totalorder %s30, 0
      %p162 = por %p160, %p161
      %s164 = sadd.s32 %s163, 1
      %p167 = scmp.eq.s32.totalorder %s24, 1
      %p168 = scmp.ne.s32.totalorder %s163, %s165
      %p169 = scmp.eq.s32.totalorder %s24, 0
      %p170 = por %p168, %p169
      %p171 = scmp.ne.s32.totalorder %s163, %s165
      %p172 = scmp.eq.s32.totalorder %s29, 1
      %p173 = por %p171, %p172
      %p174 = scmp.ne.s32.totalorder %s165, %s166
      %p175 = scmp.eq.s32.totalorder %s29, 0
      %p176 = por %p174, %p175
      %p177 = scmp.ne.s32.totalorder %s165, %s166
      %p178 = scmp.eq.s32.totalorder %s30, 1
      %p179 = por %p177, %p178
      %p181 = scmp.ne.s32.totalorder %s166, %s180
      %p182 = scmp.eq.s32.totalorder %s30, 0
      %p183 = por %p181, %p182
      %s185 = sadd.s32 %s184, 1
      %p188 = scmp.eq.s32.totalorder %s24, 1
      %p189 = scmp.ne.s32.totalorder %s184, %s186
      %p190 = scmp.eq.s32.totalorder %s24, 0
      %p191 = por %p189, %p190
      %p192 = scmp.ne.s32.totalorder %s184, %s186
      %p193 = scmp.eq.s32.totalorder %s29, 1
      %p194 = por %p192, %p193
      %p195 = scmp.ne.s32.totalorder %s186, %s187
      %p196 = scmp.eq.s32.totalorder %s29, 0
      %p197 = por %p195, %p196
      %p198 = scmp.ne.s32.totalorder %s186, %s187
      %p199 = scmp.eq.s32.totalorder %s30, 1
      %p200 = por %p198, %p199
      %p202 = scmp.ne.s32.totalorder %s187, %s201
      %p203 = scmp.eq.s32.totalorder %s30, 0
      %p204 = por %p202, %p203
      %s206 = sadd.s32 %s205, 1
      %p209 = scmp.eq.s32.totalorder %s24, 1
      %p210 = scmp.ne.s32.totalorder %s205, %s207
      %p211 = scmp.eq.s32.totalorder %s24, 0
      %p212 = por %p210, %p211
      %p213 = scmp.ne.s32.totalorder %s205, %s207
      %p214 = scmp.eq.s32.totalorder %s29, 1
      %p215 = por %p213, %p214
      %p216 = scmp.ne.s32.totalorder %s207, %s208
      %p217 = scmp.eq.s32.totalorder %s29, 0
      %p218 = por %p216, %p217
      %p219 = scmp.ne.s32.totalorder %s207, %s208
      %p220 = scmp.eq.s32.totalorder %s30, 1
      %p221 = por %p219, %p220
      %p223 = scmp.ne.s32.totalorder %s208, %s222
      %p224 = scmp.eq.s32.totalorder %s30, 0
      %p225 = por %p223, %p224
      %s227 = sadd.s32 %s226, 1
      %p230 = scmp.eq.s32.totalorder %s24, 1
      %p231 = scmp.ne.s32.totalorder %s226, %s228
      %p232 = scmp.eq.s32.totalorder %s24, 0
      %p233 = por %p231, %p232
      %p234 = scmp.ne.s32.totalorder %s226, %s228
      %p235 = scmp.eq.s32.totalorder %s29, 1
      %p236 = por %p234, %p235
      %p237 = scmp.ne.s32.totalorder %s228, %s229
      %p238 = scmp.eq.s32.totalorder %s29, 0
      %p239 = por %p237, %p238
      %p240 = scmp.ne.s32.totalorder %s228, %s229
      %p241 = scmp.eq.s32.totalorder %s30, 1
      %p242 = por %p240, %p241
      %p244 = scmp.ne.s32.totalorder %s229, %s243
      %p245 = scmp.eq.s32.totalorder %s30, 0
      %p246 = por %p244, %p245
      %s248 = sadd.s32 %s247, 1
      %p251 = scmp.eq.s32.totalorder %s24, 1
      %p252 = scmp.ne.s32.totalorder %s247, %s249
      %p253 = scmp.eq.s32.totalorder %s24, 0
      %p254 = por %p252, %p253
      %p255 = scmp.ne.s32.totalorder %s247, %s249
      %p256 = scmp.eq.s32.totalorder %s29, 1
      %p257 = por %p255, %p256
      %p258 = scmp.ne.s32.totalorder %s249, %s250
      %p259 = scmp.eq.s32.totalorder %s29, 0
      %p260 = por %p258, %p259
      %p261 = scmp.ne.s32.totalorder %s249, %s250
      %p262 = scmp.eq.s32.totalorder %s30, 1
      %p263 = por %p261, %p262
      %p265 = scmp.ne.s32.totalorder %s250, %s264
      %p266 = scmp.eq.s32.totalorder %s30, 0
      %p267 = por %p265, %p266
      %s269 = sadd.s32 %s268, 1
      %p272 = scmp.eq.s32.totalorder %s24, 1
      %p273 = scmp.ne.s32.totalorder %s268, %s270
      %p274 = scmp.eq.s32.totalorder %s24, 0
      %p275 = por %p273, %p274
      %p276 = scmp.ne.s32.totalorder %s268, %s270
      %p277 = scmp.eq.s32.totalorder %s29, 1
      %p278 = por %p276, %p277
      %p279 = scmp.ne.s32.totalorder %s270, %s271
      %p280 = scmp.eq.s32.totalorder %s29, 0
      %p281 = por %p279, %p280
      %p282 = scmp.ne.s32.totalorder %s270, %s271
      %p283 = scmp.eq.s32.totalorder %s30, 1
      %p284 = por %p282, %p283
      %p286 = scmp.ne.s32.totalorder %s271, %s285
      %p287 = scmp.eq.s32.totalorder %s30, 0
      %p288 = por %p286, %p287
      %s289 = ssub.s32 %s24, %s31
      %p290 = scmp.eq.s32.totalorder %s289, 0
      %s292 = sadd.s32 %s291, 1
      %s293 = scalar_select %p290, %s291, %s292
      %p296 = pneg %p290
      %p297 = scmp.eq.s32.totalorder %s24, 1
      %p298 = por %p296, %p297
      %p299 = scmp.ne.s32.totalorder %s291, %s294
      %p300 = scmp.eq.s32.totalorder %s24, 0
      %p301 = por %p299, %p300
      %p302 = scmp.ne.s32.totalorder %s291, %s294
      %p303 = scmp.eq.s32.totalorder %s29, 1
      %p304 = por %p302, %p303
      %p305 = scmp.ne.s32.totalorder %s294, %s295
      %p306 = scmp.eq.s32.totalorder %s29, 0
      %p307 = por %p305, %p306
      %p308 = scmp.ne.s32.totalorder %s294, %s295
      %p309 = scmp.eq.s32.totalorder %s30, 1
      %p310 = por %p308, %p309
      %p312 = scmp.ne.s32.totalorder %s295, %s311
      %p313 = scmp.eq.s32.totalorder %s30, 0
      %p314 = por %p312, %p313
      %p315 = scmp.le.s32.totalorder 1, %s24
      %p316 = scmp.lt.s32.totalorder %s24, 3
      %p317 = pnand %p315, %p316
      %p318 = pneg %p317
      // Predicated region
      $region9: #{fwd.1} parent=5 // pred_check
        _
      $region10: #{fwd.1} parent=5 // pred_check_branch
        %320 = sbr.rel (%p317) target = $region12
      $region11: #{fwd.1} parent=5 // pred_region
        %s321 = ssub.s32 %s24, 1
        // Predicated region
        $region13: #{fwd.1} parent=11 // pred_check
          %p322 = pneg %p71
        $region14: #{fwd.1} parent=11 // pred_check_branch
          %324 = sbr.rel (%p322) target = $region16
        $region15: #{fwd.1} parent=11 // pred_region
          %s326 = ssub.s32 16, 16
          %327 = vsyncadd [#allocation3], %s326
          %s329 = sshll.u32 [#allocation2], 4
          %s330 = int_to_ptr.vmem [resolvable:$true] %s329
          %332 = dma.hbm_to_vmem [thread:$0]  %s1, 16, %s330, [#allocation3]
        $region16: #{fwd.1} parent=11 // pred_fallthru
          _
        // Predicated region
        $region17: #{fwd.1} parent=11 // pred_check
          %p333 = pneg %p92
        $region18: #{fwd.1} parent=11 // pred_check_branch
          %335 = sbr.rel (%p333) target = $region20
        $region19: #{fwd.1} parent=11 // pred_region
          %s337 = ssub.s32 256, 256
          %338 = vsyncadd [#allocation6], %s337
          %s339 = sshll.u32 [#allocation5], 4
          %s340 = int_to_ptr.vmem [resolvable:$true] %s339
          %345 = dma.hbm_to_vmem [thread:$0]  %s2, 256, %s340, [#allocation6], 64, 64, 4
        $region20: #{fwd.1} parent=11 // pred_fallthru
          _
        // Predicated region
        $region21: #{fwd.1} parent=11 // pred_check
          %p346 = pneg %p113
        $region22: #{fwd.1} parent=11 // pred_check_branch
          %348 = sbr.rel (%p346) target = $region24
        $region23: #{fwd.1} parent=11 // pred_region
          %s350 = ssub.s32 16, 16
          %351 = vsyncadd [#allocation6], %s350
          %s353 = sshll.u32 [#allocation7], 4
          %s354 = int_to_ptr.vmem [resolvable:$true] %s353
          %356 = dma.hbm_to_vmem [thread:$0]  %s3, 16, %s354, [#allocation6]
        $region24: #{fwd.1} parent=11 // pred_fallthru
          _
        // Predicated region
        $region25: #{fwd.1} parent=11 // pred_check
          %p357 = pneg %p134
        $region26: #{fwd.1} parent=11 // pred_check_branch
          %359 = sbr.rel (%p357) target = $region28
        $region27: #{fwd.1} parent=11 // pred_region
          %s361 = ssub.s32 128, 128
          %362 = vsyncadd [#allocation9], %s361
          %s364 = sshll.u32 [#allocation8], 4
          %s365 = int_to_ptr.vmem [resolvable:$true] %s364
          %367 = dma.hbm_to_vmem [thread:$0]  %s4, 128, %s365, [#allocation9]
        $region28: #{fwd.1} parent=11 // pred_fallthru
          _
        // Predicated region
        $region29: #{fwd.1} parent=11 // pred_check
          %p368 = pneg %p155
        $region30: #{fwd.1} parent=11 // pred_check_branch
          %370 = sbr.rel (%p368) target = $region32
        $region31: #{fwd.1} parent=11 // pred_region
          _
        $region32: #{fwd.1} parent=11 // pred_fallthru
          _
        // Predicated region
        $region33: #{fwd.1} parent=11 // pred_check
          %p371 = pneg %p176
        $region34: #{fwd.1} parent=11 // pred_check_branch
          %373 = sbr.rel (%p371) target = $region36
        $region35: #{fwd.1} parent=11 // pred_region
          _
        $region36: #{fwd.1} parent=11 // pred_fallthru
          _
        // Predicated region
        $region37: #{fwd.1} parent=11 // pred_check
          %p374 = pneg %p197
        $region38: #{fwd.1} parent=11 // pred_check_branch
          %376 = sbr.rel (%p374) target = $region40
        $region39: #{fwd.1} parent=11 // pred_region
          _
        $region40: #{fwd.1} parent=11 // pred_fallthru
          _
        // Predicated region
        $region41: #{fwd.1} parent=11 // pred_check
          %p377 = pneg %p218
        $region42: #{fwd.1} parent=11 // pred_check_branch
          %379 = sbr.rel (%p377) target = $region44
        $region43: #{fwd.1} parent=11 // pred_region
          %s381 = ssub.s32 512, 512
          %382 = vsyncadd [#allocation9], %s381
          %s383 = sshll.u32 [#allocation10], 4
          %s384 = int_to_ptr.vmem [resolvable:$true] %s383
          %389 = dma.hbm_to_vmem [thread:$0]  %s8, 512, %s384, [#allocation9], 64, 64, 4
        $region44: #{fwd.1} parent=11 // pred_fallthru
          _
        // Predicated region
        $region45: #{fwd.1} parent=11 // pred_check
          %p390 = pneg %p239
        $region46: #{fwd.1} parent=11 // pred_check_branch
          %392 = sbr.rel (%p390) target = $region48
        $region47: #{fwd.1} parent=11 // pred_region
          _
        $region48: #{fwd.1} parent=11 // pred_fallthru
          _
        // Predicated region
        $region49: #{fwd.1} parent=11 // pred_check
          %p393 = pneg %p260
        $region50: #{fwd.1} parent=11 // pred_check_branch
          %395 = sbr.rel (%p393) target = $region52
        $region51: #{fwd.1} parent=11 // pred_region
          _
        $region52: #{fwd.1} parent=11 // pred_fallthru
          _
        // Predicated region
        $region53: #{fwd.1} parent=11 // pred_check
          %p396 = pneg %p281
        $region54: #{fwd.1} parent=11 // pred_check_branch
          %398 = sbr.rel (%p396) target = $region56
        $region55: #{fwd.1} parent=11 // pred_region
          _
        $region56: #{fwd.1} parent=11 // pred_fallthru
          _
      $region12: #{fwd.1} parent=5 // pred_fallthru
        _
      %p399 = scmp.lt.s32.totalorder %s24, 2
      // Predicated region
      $region57: #{fwd.1} parent=5 // pred_check
        %p400 = pneg %p399
      $region58: #{fwd.1} parent=5 // pred_check_branch
        %402 = sbr.rel (%p400) target = $region60
      $region59: #{fwd.1} parent=5 // pred_region
        // Predicated region
        $region61: #{fwd.1} parent=59 // pred_check
          %p403 = pneg %p44
        $region62: #{fwd.1} parent=59 // pred_check_branch
          %405 = sbr.rel (%p403) target = $region64
        $region63: #{fwd.1} parent=59 // pred_region
          %s406 = smul.u32 2, %s24
          %p407 = scmp.lt.s32.totalorder %s406, 3
          %s408 = scalar_select %p407, %s406, 3
          %s409 = smul.addr %s408, 8
          %s410 = scalar_lea.vmem %s0, %s409
          %s411 = smul.u32 2, %s24
        $region64: #{fwd.1} parent=59 // pred_fallthru
          _
      $region60: #{fwd.1} parent=5 // pred_fallthru
        _
      %p412 = scmp.le.s32.totalorder 1, %s24
      %p413 = scmp.lt.s32.totalorder %s24, 3
      %p414 = pnand %p412, %p413
      %p415 = pneg %p414
      // Predicated region
      $region65: #{fwd.1} parent=5 // pred_check
        _
      $region66: #{fwd.1} parent=5 // pred_check_branch
        %417 = sbr.rel (%p414) target = $region68
      $region67: #{fwd.1} parent=5 // pred_region
        %s418 = ssub.s32 %s24, 1
        // Predicated region
        $region69: #{fwd.1} parent=67 // pred_check
          %p419 = pneg %p71
        $region70: #{fwd.1} parent=67 // pred_check_branch
          %421 = sbr.rel (%p419) target = $region72
        $region71: #{fwd.1} parent=67 // pred_region
          %422 = dma.done [#allocation3], 16
        $region72: #{fwd.1} parent=67 // pred_fallthru
          _
        // Predicated region
        $region73: #{fwd.1} parent=67 // pred_check
          %p423 = pneg %p92
        $region74: #{fwd.1} parent=67 // pred_check_branch
          %425 = sbr.rel (%p423) target = $region76
        $region75: #{fwd.1} parent=67 // pred_region
          %426 = dma.done [#allocation6], 256
        $region76: #{fwd.1} parent=67 // pred_fallthru
          _
        // Predicated region
        $region77: #{fwd.1} parent=67 // pred_check
          %p427 = pneg %p113
        $region78: #{fwd.1} parent=67 // pred_check_branch
          %429 = sbr.rel (%p427) target = $region80
        $region79: #{fwd.1} parent=67 // pred_region
          %430 = dma.done [#allocation6], 16
        $region80: #{fwd.1} parent=67 // pred_fallthru
          _
        // Predicated region
        $region81: #{fwd.1} parent=67 // pred_check
          %p431 = pneg %p134
        $region82: #{fwd.1} parent=67 // pred_check_branch
          %433 = sbr.rel (%p431) target = $region84
        $region83: #{fwd.1} parent=67 // pred_region
          %434 = dma.done [#allocation9], 128
        $region84: #{fwd.1} parent=67 // pred_fallthru
          _
        // Predicated region
        $region85: #{fwd.1} parent=67 // pred_check
          %p435 = pneg %p218
        $region86: #{fwd.1} parent=67 // pred_check_branch
          %437 = sbr.rel (%p435) target = $region88
        $region87: #{fwd.1} parent=67 // pred_region
          %438 = dma.done [#allocation9], 512
        $region88: #{fwd.1} parent=67 // pred_fallthru
          _
        %s439 = smul.u32 2, %s29
        %p440 = scmp.lt.s32.totalorder %s439, 3
        %s441 = scalar_select %p440, %s439, 3
        %s442 = smul.addr %s441, 8
        %s443 = scalar_lea.vmem %s0, %s442
        %p444 = pneg %p50
        %p445 = pneg %p47
        %p446 = pneg %p71
        %p447 = pneg %p68
        %p448 = pneg %p92
        %p449 = pneg %p89
        %p450 = pneg %p113
        %p451 = pneg %p110
        %p452 = pneg %p134
        %p453 = pneg %p131
        %p454 = pneg %p155
        %p455 = pneg %p152
        %p456 = pneg %p176
        %p457 = pneg %p173
        %p458 = pneg %p197
        %p459 = pneg %p194
        %p460 = pneg %p218
        %p461 = pneg %p215
        %p462 = pneg %p239
        %p463 = pneg %p236
        %p464 = pneg %p260
        %p465 = pneg %p257
        %p466 = pneg %p281
        %p467 = pneg %p278
        %p468 = pneg %p307
        %p469 = pneg %p304
        %s470 = sand.u32 %s294, 1
        %s471 = scalar_lea.sflag [#allocation4], %s470
        %s472 = sand.u32 %s294, 1
        %s473 = smul.addr %s472, 16
        %s474 = scalar_lea.vmem [#allocation11], %s473
        %s475 = smul.u32 2, %s29
        %p476 = scmp.lt.s32.totalorder %s475, 3
        %s477 = scalar_select %p476, %s475, 3
        %s478 = smul.addr %s477, 8
        %s479 = scalar_lea.vmem %s0, %s478
        %s480 = smul.u32 2, %s29
        %s481 = smul.u32 2, %s29
        %v483 = vld [vmem:[%s479] sm:$0xff]
        %v484 = vld [vmem:[%s479 + $0x8] sm:$0xff]
        %v485 = vmul.f32 %v483, %v483
        %v486 = vmul.f32 %v484, %v484
        %vm487 = vcmask 261120
        %v488 = vsel %vm487, %v485, 0.0
        %489 = vadd.xlane.f32.xlu0 %v488
        %v490 = vpop.xlane.xlu0 %489
        %v491 = vsel %vm487, %v486, 0.0
        %492 = vadd.xlane.f32.xlu0 %v491
        %v493 = vpop.xlane.xlu0 %492
        %v494 = vrcp.pop 32.0
        %v495 = vmul.f32 %v490, %v494
        %v496 = vmul.f32 %v493, %v494
        %v497 = vadd.f32 %v495, 1e-05
        %v498 = vadd.f32 %v496, 1e-05
        %v499 = vrsqrt.pop %v497
        %v500 = vrsqrt.pop %v498
        %v501 = vmul.f32 %v483, %v499
        %v502 = vmul.f32 %v484, %v500
        %v503 = vld [vmem:[#allocation2] sm:$0x1]
        %v505 = vlaneseq
        %v506 = vshrl.u32 %v505, 7
        %v507 = vsub.s32 0, %v506
        %v508 = vrot.slane %v503, %v507
        %v510 = vmul.f32 %v501, %v508
        %v511 = vmul.f32 %v502, %v508
        %v512 = vpack.c.bf16 %v511, %v510
        %v513 = vld [vmem:[#allocation5] sm:$0xf]
        %v514 = vld [vmem:[#allocation5 + $0x4] sm:$0xf]
        %v515 = vld [vmem:[#allocation5 + $0x8] sm:$0xf]
        %v516 = vld [vmem:[#allocation5 + $0xc] sm:$0xf]
        %v517 = vld [vmem:[#allocation7] sm:$0x1]
        %v519 = vlaneseq
        %v520 = vshrl.u32 %v519, 7
        %v521 = vsub.s32 0, %v520
        %v522 = vrot.slane %v517, %v521
        %v528 = vunpack.c.l.b16 %v513
        %v529 = vunpack.c.l.b16 %v514
        %v530 = vunpack.c.l.b16 %v515
        %v531 = vunpack.c.l.b16 %v516
        %v532 = vpack.c.b16 %v529, %v528
        %v533 = vpack.c.b16 %v531, %v530
        %v537 = vsel %vm487, %v512, 0
        %539 = vmatprep.subr.bf16.mxu0 0
        %540 = vmatpush1.bf16.msra.mxu0 0
        %541 = vmatprep.subr.bf16.mxu0 0
        %542 = vmatpush1.bf16.msra.mxu0 0
        %543 = vmatprep.subr.bf16.mxu0 0
        %544 = vmatpush1.bf16.msra.mxu0 0
        %545 = vmatprep.subr.bf16.mxu0 0
        %546 = vmatpush1.bf16.msra.mxu0 0
        %547 = vmatprep.subr.bf16.mxu0 0
        %548 = vmatpush1.bf16.msra.mxu0 0
        %549 = vmatprep.subr.bf16.mxu0 0
        %550 = vmatpush1.bf16.msra.mxu0 0
        %551 = vmatprep.subr.bf16.mxu0 0
        %552 = vmatpush1.bf16.msra.mxu0 %v533
        %553 = vmatprep.subr.bf16.mxu0 0
        %554 = vmatpush1.bf16.msra.mxu0 %v532
        %555 = vmatprep.subr.bf16.mxu0 0
        %556 = vmatpush2.bf16.msra.mxu0 0
        %557 = vmatprep.subr.bf16.mxu0 0
        %558 = vmatpush2.bf16.msra.mxu0 0
        %559 = vmatprep.subr.bf16.mxu0 0
        %560 = vmatpush2.bf16.msra.mxu0 0
        %561 = vmatprep.subr.bf16.mxu0 0
        %562 = vmatpush2.bf16.msra.mxu0 0
        %563 = vmatprep.subr.bf16.mxu0 0
        %564 = vmatpush2.bf16.msra.mxu0 0
        %565 = vmatprep.subr.bf16.mxu0 0
        %566 = vmatpush2.bf16.msra.mxu0 0
        %567 = vmatprep.subr.bf16.mxu0 0
        %568 = vmatpush2.bf16.msra.mxu0 0
        %569 = vmatprep.subr.bf16.mxu0 0
        %570 = vmatpush2.bf16.msra.mxu0 0
        %571 = vmatprep.mubr.bf16.mxu0 0
        %572 = vmatmul.mubr.bf16.gmra.mxu0 %v537
        %v573 = vpop.f32.mrf.mxu0
        %v574 = vadd.f32 %v522, %v573
        %v575 = vpop.f32.mrf.mxu0
        %v576 = vpop.f32.mrf.mxu0
        %v577 = vadd.f32 %v522, %v576
        %v578 = vpop.f32.mrf.mxu0
        %579 = vdwg.mxu0
        %v580 = vxor.u32 %v574, 2147483648
        %v581 = vxor.u32 %v577, 2147483648
        %v582 = vmul.f32 %v580, 1.442695
        %v583 = vpow.pop %v582
        %v584 = vmul.f32 %v581, 1.442695
        %v585 = vpow.pop %v584
        %v586 = vadd.f32 %v583, 1.0
        %v587 = vadd.f32 %v585, 1.0
        %v588 = vrcp.pop %v586
        %v589 = vmul.f32 1.0, %v588
        %v590 = vrcp.pop %v587
        %v591 = vmul.f32 1.0, %v590
        %v592 = vmul.f32 %v574, %v589
        %v593 = vmul.f32 %v577, %v591
        %v594 = vlaneseq
        %v595 = vand.u32 %v594, 127
        %vm596 = vcmp.eq.s32.totalorder %v595, 0
        %vm597 = vcmask 1048064
        %598 = vrot.lane.b32.xlu0 %v574, 64
        %v599 = vpop.permute.xlu0 %598
        %v600 = vsel %vm597, %v599, %v574
        %601 = vrot.lane.b32.xlu0 %v577, 64
        %v602 = vpop.permute.xlu0 %601
        %v603 = vsel %vm597, %v602, %v577
        %604 = vrot.lane.b32.xlu0 %v600, 64
        %v605 = vpop.permute.xlu0 %604
        %606 = vrot.lane.b32.xlu0 %v603, 64
        %v607 = vpop.permute.xlu0 %606
        %v608 = vsel %vm597, %v605, %v574
        %v609 = vsel %vm597, %v607, %v577
        %612 = vrot.lane.b32.xlu0 %v608, 65
        %v613 = vpop.permute.xlu0 %612
        %614 = vrot.lane.b32.xlu0 %v609, 65
        %v615 = vpop.permute.xlu0 %614
        %v618 = vsel %vm596, 0.0, %v613
        %v619 = vsel %vm596, 0.0, %v615
        %vm620 = vcmp.eq.s32.totalorder %v595, 63
        %621 = vrot.lane.b32.xlu0 %v608, 127
        %v622 = vpop.permute.xlu0 %621
        %623 = vrot.lane.b32.xlu0 %v609, 127
        %v624 = vpop.permute.xlu0 %623
        %v627 = vsel %vm620, 0.0, %v622
        %v628 = vsel %vm620, 0.0, %v624
        %v629 = vld [vmem:[#allocation8] sm:$0xff]
        %v630 = vld [vmem:[%s5] sm:$0xff]
        %632 = vset.pattern.permute.xlu0 0
        %633 = vperm.xlu0 %632, %v630
        %v634 = vpop.permute.xlu0 %633
        %vm636 = vcmask 195584
        %v638 = vsel %vm636, %v629, 0
        %640 = vmatprep.subr.mxu0 0.0
        %641 = vmatpush1.msra.mxu0 0.0
        %642 = vmatprep.subr.mxu0 0.0
        %643 = vmatpush1.msra.mxu0 0.0
        %644 = vmatprep.subr.mxu0 0.0
        %645 = vmatpush1.msra.mxu0 0.0
        %646 = vmatprep.subr.mxu0 0.0
        %647 = vmatpush1.msra.mxu0 0.0
        %648 = vmatprep.subr.mxu0 0.0
        %649 = vmatpush1.msra.mxu0 0.0
        %650 = vmatprep.subr.mxu0 0.0
        %651 = vmatpush1.msra.mxu0 0.0
        %652 = vmatprep.subr.mxu0 0.0
        %653 = vmatpush1.msra.mxu0 0.0
        %654 = vmatprep.subr.mxu0 0.0
        %655 = vmatpush1.msra.mxu0 0.0
        %656 = vmatprep.subr.mxu0 0.0
        %657 = vmatpush1.msra.mxu0 0.0
        %658 = vmatprep.subr.mxu0 0.0
        %659 = vmatpush1.msra.mxu0 0.0
        %660 = vmatprep.subr.mxu0 0.0
        %661 = vmatpush1.msra.mxu0 0.0
        %662 = vmatprep.subr.mxu0 0.0
        %663 = vmatpush1.msra.mxu0 0.0
        %664 = vmatprep.subr.mxu0 0.0
        %665 = vmatpush1.msra.mxu0 0.0
        %666 = vmatprep.subr.mxu0 0.0
        %667 = vmatpush1.msra.mxu0 %v627
        %668 = vmatprep.subr.mxu0 0.0
        %669 = vmatpush1.msra.mxu0 %v574
        %670 = vmatprep.subr.mxu0 0.0
        %671 = vmatpush1.msra.mxu0 %v618
        %672 = vmatprep.subr.mxu0 0.0
        %673 = vmatpush2.msra.mxu0 0.0
        %674 = vmatprep.subr.mxu0 0.0
        %675 = vmatpush2.msra.mxu0 0.0
        %676 = vmatprep.subr.mxu0 0.0
        %677 = vmatpush2.msra.mxu0 0.0
        %678 = vmatprep.subr.mxu0 0.0
        %679 = vmatpush2.msra.mxu0 0.0
        %680 = vmatprep.subr.mxu0 0.0
        %681 = vmatpush2.msra.mxu0 0.0
        %682 = vmatprep.subr.mxu0 0.0
        %683 = vmatpush2.msra.mxu0 0.0
        %684 = vmatprep.subr.mxu0 0.0
        %685 = vmatpush2.msra.mxu0 0.0
        %686 = vmatprep.subr.mxu0 0.0
        %687 = vmatpush2.msra.mxu0 0.0
        %688 = vmatprep.subr.mxu0 0.0
        %689 = vmatpush2.msra.mxu0 0.0
        %690 = vmatprep.subr.mxu0 0.0
        %691 = vmatpush2.msra.mxu0 0.0
        %692 = vmatprep.subr.mxu0 0.0
        %693 = vmatpush2.msra.mxu0 0.0
        %694 = vmatprep.subr.mxu0 0.0
        %695 = vmatpush2.msra.mxu0 0.0
        %696 = vmatprep.subr.mxu0 0.0
        %697 = vmatpush2.msra.mxu0 0.0
        %698 = vmatprep.subr.mxu0 0.0
        %699 = vmatpush2.msra.mxu0 0.0
        %700 = vmatprep.subr.mxu0 0.0
        %701 = vmatpush2.msra.mxu0 0.0
        %702 = vmatprep.subr.mxu0 0.0
        %703 = vmatpush2.msra.mxu0 0.0
        %704 = vmatprep.mubr.f32.mxu0 0.0
        %705 = vmatmul.mubr.f32.gmra.mxu0 %v638
        %v706 = vpop.f32.mrf.mxu0
        %v707 = vadd.f32 %v634, %v706
        %v708 = vpop.f32.mrf.mxu0
        %709 = vdwg.mxu0
        %710 = vmatprep.subr.mxu0 0.0
        %711 = vmatpush1.msra.mxu0 0.0
        %712 = vmatprep.subr.mxu0 0.0
        %713 = vmatpush1.msra.mxu0 0.0
        %714 = vmatprep.subr.mxu0 0.0
        %715 = vmatpush1.msra.mxu0 0.0
        %716 = vmatprep.subr.mxu0 0.0
        %717 = vmatpush1.msra.mxu0 0.0
        %718 = vmatprep.subr.mxu0 0.0
        %719 = vmatpush1.msra.mxu0 0.0
        %720 = vmatprep.subr.mxu0 0.0
        %721 = vmatpush1.msra.mxu0 0.0
        %722 = vmatprep.subr.mxu0 0.0
        %723 = vmatpush1.msra.mxu0 0.0
        %724 = vmatprep.subr.mxu0 0.0
        %725 = vmatpush1.msra.mxu0 0.0
        %726 = vmatprep.subr.mxu0 0.0
        %727 = vmatpush1.msra.mxu0 0.0
        %728 = vmatprep.subr.mxu0 0.0
        %729 = vmatpush1.msra.mxu0 0.0
        %730 = vmatprep.subr.mxu0 0.0
        %731 = vmatpush1.msra.mxu0 0.0
        %732 = vmatprep.subr.mxu0 0.0
        %733 = vmatpush1.msra.mxu0 0.0
        %734 = vmatprep.subr.mxu0 0.0
        %735 = vmatpush1.msra.mxu0 0.0
        %736 = vmatprep.subr.mxu0 0.0
        %737 = vmatpush1.msra.mxu0 %v628
        %738 = vmatprep.subr.mxu0 0.0
        %739 = vmatpush1.msra.mxu0 %v577
        %740 = vmatprep.subr.mxu0 0.0
        %741 = vmatpush1.msra.mxu0 %v619
        %742 = vmatprep.subr.mxu0 0.0
        %743 = vmatpush2.msra.mxu0 0.0
        %744 = vmatprep.subr.mxu0 0.0
        %745 = vmatpush2.msra.mxu0 0.0
        %746 = vmatprep.subr.mxu0 0.0
        %747 = vmatpush2.msra.mxu0 0.0
        %748 = vmatprep.subr.mxu0 0.0
        %749 = vmatpush2.msra.mxu0 0.0
        %750 = vmatprep.subr.mxu0 0.0
        %751 = vmatpush2.msra.mxu0 0.0
        %752 = vmatprep.subr.mxu0 0.0
        %753 = vmatpush2.msra.mxu0 0.0
        %754 = vmatprep.subr.mxu0 0.0
        %755 = vmatpush2.msra.mxu0 0.0
        %756 = vmatprep.subr.mxu0 0.0
        %757 = vmatpush2.msra.mxu0 0.0
        %758 = vmatprep.subr.mxu0 0.0
        %759 = vmatpush2.msra.mxu0 0.0
        %760 = vmatprep.subr.mxu0 0.0
        %761 = vmatpush2.msra.mxu0 0.0
        %762 = vmatprep.subr.mxu0 0.0
        %763 = vmatpush2.msra.mxu0 0.0
        %764 = vmatprep.subr.mxu0 0.0
        %765 = vmatpush2.msra.mxu0 0.0
        %766 = vmatprep.subr.mxu0 0.0
        %767 = vmatpush2.msra.mxu0 0.0
        %768 = vmatprep.subr.mxu0 0.0
        %769 = vmatpush2.msra.mxu0 0.0
        %770 = vmatprep.subr.mxu0 0.0
        %771 = vmatpush2.msra.mxu0 0.0
        %772 = vmatprep.subr.mxu0 0.0
        %773 = vmatpush2.msra.mxu0 0.0
        %774 = vmatprep.mubr.f32.mxu0 0.0
        %775 = vmatmul.mubr.f32.gmra.mxu0 %v638
        %v776 = vpop.f32.mrf.mxu0
        %v777 = vadd.f32 %v634, %v776
        %v778 = vpop.f32.mrf.mxu0
        %779 = vdwg.mxu0
        %v780 = vxor.u32 %v707, 2147483648
        %v781 = vxor.u32 %v777, 2147483648
        %v782 = vmul.f32 %v780, 1.442695
        %v783 = vpow.pop %v782
        %v784 = vmul.f32 %v781, 1.442695
        %v785 = vpow.pop %v784
        %v786 = vadd.f32 %v783, 1.0
        %v787 = vadd.f32 %v785, 1.0
        %v788 = vrcp.pop %v786
        %v789 = vmul.f32 1.0, %v788
        %v790 = vrcp.pop %v787
        %v791 = vmul.f32 1.0, %v790
        %v792 = vmul.f32 %v707, %v789
        %v793 = vmul.f32 %v777, %v791
        %v794 = vpack.c.bf16 %v793, %v792
        %v795 = vld [vmem:[%s6] sm:$0xf]
        %v796 = vld [vmem:[%s6 + $0x4] sm:$0xf]
        %v797 = vld [vmem:[%s6 + $0x8] sm:$0xf]
        %v798 = vld [vmem:[%s6 + $0xc] sm:$0xf]
        %v799 = vld [vmem:[%s6 + $0x10] sm:$0xf]
        %v800 = vld [vmem:[%s6 + $0x14] sm:$0xf]
        %v801 = vld [vmem:[%s6 + $0x18] sm:$0xf]
        %v802 = vld [vmem:[%s6 + $0x1c] sm:$0xf]
        %v803 = vld [vmem:[%s7] sm:$0x1]
        %v805 = vlaneseq
        %v806 = vshrl.u32 %v805, 7
        %v807 = vsub.s32 0, %v806
        %v808 = vrot.slane %v803, %v807
        %v818 = vunpack.c.l.b16 %v795
        %v819 = vunpack.c.l.b16 %v796
        %v820 = vunpack.c.l.b16 %v797
        %v821 = vunpack.c.l.b16 %v798
        %v822 = vunpack.c.l.b16 %v799
        %v823 = vunpack.c.l.b16 %v800
        %v824 = vunpack.c.l.b16 %v801
        %v825 = vunpack.c.l.b16 %v802
        %v826 = vpack.c.b16 %v819, %v818
        %v827 = vpack.c.b16 %v821, %v820
        %v828 = vpack.c.b16 %v823, %v822
        %v829 = vpack.c.b16 %v825, %v824
        %vm834 = vcmask 523264
        %v836 = vsel %vm834, %v794, 0
        %838 = vmatprep.subr.bf16.mxu0 0
        %839 = vmatpush1.bf16.msra.mxu0 0
        %840 = vmatprep.subr.bf16.mxu0 0
        %841 = vmatpush1.bf16.msra.mxu0 0
        %842 = vmatprep.subr.bf16.mxu0 0
        %843 = vmatpush1.bf16.msra.mxu0 0
        %844 = vmatprep.subr.bf16.mxu0 0
        %845 = vmatpush1.bf16.msra.mxu0 0
        %846 = vmatprep.subr.bf16.mxu0 0
        %847 = vmatpush1.bf16.msra.mxu0 %v829
        %848 = vmatprep.subr.bf16.mxu0 0
        %849 = vmatpush1.bf16.msra.mxu0 %v828
        %850 = vmatprep.subr.bf16.mxu0 0
        %851 = vmatpush1.bf16.msra.mxu0 %v827
        %852 = vmatprep.subr.bf16.mxu0 0
        %853 = vmatpush1.bf16.msra.mxu0 %v826
        %854 = vmatprep.subr.bf16.mxu0 0
        %855 = vmatpush2.bf16.msra.mxu0 0
        %856 = vmatprep.subr.bf16.mxu0 0
        %857 = vmatpush2.bf16.msra.mxu0 0
        %858 = vmatprep.subr.bf16.mxu0 0
        %859 = vmatpush2.bf16.msra.mxu0 0
        %860 = vmatprep.subr.bf16.mxu0 0
        %861 = vmatpush2.bf16.msra.mxu0 0
        %862 = vmatprep.subr.bf16.mxu0 0
        %863 = vmatpush2.bf16.msra.mxu0 0
        %864 = vmatprep.subr.bf16.mxu0 0
        %865 = vmatpush2.bf16.msra.mxu0 0
        %866 = vmatprep.subr.bf16.mxu0 0
        %867 = vmatpush2.bf16.msra.mxu0 0
        %868 = vmatprep.subr.bf16.mxu0 0
        %869 = vmatpush2.bf16.msra.mxu0 0
        %870 = vmatprep.mubr.bf16.mxu0 0
        %871 = vmatmul.mubr.bf16.gmra.mxu0 %v836
        %v872 = vpop.f32.mrf.mxu0
        %v873 = vadd.f32 %v808, %v872
        %v874 = vpop.f32.mrf.mxu0
        %v875 = vpop.f32.mrf.mxu0
        %v876 = vadd.f32 %v808, %v875
        %v877 = vpop.f32.mrf.mxu0
        %878 = vdwg.mxu0
        %v879 = vpack.c.bf16 %v876, %v873
        %v880 = vld [vmem:[#allocation10] sm:$0xf]
        %v881 = vld [vmem:[#allocation10 + $0x4] sm:$0xf]
        %v882 = vld [vmem:[#allocation10 + $0x8] sm:$0xf]
        %v883 = vld [vmem:[#allocation10 + $0xc] sm:$0xf]
        %v884 = vld [vmem:[#allocation10 + $0x10] sm:$0xf]
        %v885 = vld [vmem:[#allocation10 + $0x14] sm:$0xf]
        %v886 = vld [vmem:[#allocation10 + $0x18] sm:$0xf]
        %v887 = vld [vmem:[#allocation10 + $0x1c] sm:$0xf]
        %v888 = vld [vmem:[%s9] sm:$0x1]
        %v890 = vlaneseq
        %v891 = vshrl.u32 %v890, 7
        %v892 = vsub.s32 0, %v891
        %v893 = vrot.slane %v888, %v892
        %v903 = vunpack.c.l.b16 %v880
        %v904 = vunpack.c.l.b16 %v881
        %v905 = vunpack.c.l.b16 %v882
        %v906 = vunpack.c.l.b16 %v883
        %v907 = vunpack.c.l.b16 %v884
        %v908 = vunpack.c.l.b16 %v885
        %v909 = vunpack.c.l.b16 %v886
        %v910 = vunpack.c.l.b16 %v887
        %v911 = vpack.c.b16 %v904, %v903
        %v912 = vpack.c.b16 %v906, %v905
        %v913 = vpack.c.b16 %v908, %v907
        %v914 = vpack.c.b16 %v910, %v909
        %v920 = vsel %vm834, %v879, 0
        %922 = vmatprep.subr.bf16.mxu0 0
        %923 = vmatpush1.bf16.msra.mxu0 0
        %924 = vmatprep.subr.bf16.mxu0 0
        %925 = vmatpush1.bf16.msra.mxu0 0
        %926 = vmatprep.subr.bf16.mxu0 0
        %927 = vmatpush1.bf16.msra.mxu0 0
        %928 = vmatprep.subr.bf16.mxu0 0
        %929 = vmatpush1.bf16.msra.mxu0 0
        %930 = vmatprep.subr.bf16.mxu0 0
        %931 = vmatpush1.bf16.msra.mxu0 %v914
        %932 = vmatprep.subr.bf16.mxu0 0
        %933 = vmatpush1.bf16.msra.mxu0 %v913
        %934 = vmatprep.subr.bf16.mxu0 0
        %935 = vmatpush1.bf16.msra.mxu0 %v912
        %936 = vmatprep.subr.bf16.mxu0 0
        %937 = vmatpush1.bf16.msra.mxu0 %v911
        %938 = vmatprep.subr.bf16.mxu0 0
        %939 = vmatpush2.bf16.msra.mxu0 0
        %940 = vmatprep.subr.bf16.mxu0 0
        %941 = vmatpush2.bf16.msra.mxu0 0
        %942 = vmatprep.subr.bf16.mxu0 0
        %943 = vmatpush2.bf16.msra.mxu0 0
        %944 = vmatprep.subr.bf16.mxu0 0
        %945 = vmatpush2.bf16.msra.mxu0 0
        %946 = vmatprep.subr.bf16.mxu0 0
        %947 = vmatpush2.bf16.msra.mxu0 0
        %948 = vmatprep.subr.bf16.mxu0 0
        %949 = vmatpush2.bf16.msra.mxu0 0
        %950 = vmatprep.subr.bf16.mxu0 0
        %951 = vmatpush2.bf16.msra.mxu0 0
        %952 = vmatprep.subr.bf16.mxu0 0
        %953 = vmatpush2.bf16.msra.mxu0 0
        %954 = vmatprep.mubr.bf16.mxu0 0
        %955 = vmatmul.mubr.bf16.gmra.mxu0 %v920
        %v956 = vpop.f32.mrf.mxu0
        %v957 = vadd.f32 %v893, %v956
        %v958 = vpop.f32.mrf.mxu0
        %v959 = vpop.f32.mrf.mxu0
        %v960 = vadd.f32 %v893, %v959
        %v961 = vpop.f32.mrf.mxu0
        %962 = vdwg.mxu0
        %vm963 = vcmp.gt.f32.partialorder %v957, 20.0
        %vm964 = vcmp.gt.f32.partialorder %v960, 20.0
        %v965 = vmin.f32 %v957, 20.0
        %v966 = vmin.f32 %v960, 20.0
        %v967 = vmul.f32 %v965, 1.442695
        %v968 = vpow.pop %v967
        %v969 = vmul.f32 %v966, 1.442695
        %v970 = vpow.pop %v969
        %v971 = vadd.f32 %v968, 1.0
        %v972 = vlog2.pop %v971
        %v973 = vmul.f32 %v972, 0.6931472
        %v974 = vmul.f32 -0.5, %v968
        %v975 = vadd.f32 %v974, 1.0
        %v976 = vmul.f32 %v975, %v968
        %v977 = vand.u32 2147483647, %v968
        %vm978 = vcmp.lt.f32.partialorder %v977, 0.0004427343
        %v979 = vsel %vm978, %v976, %v973
        %v980 = vadd.f32 %v970, 1.0
        %v981 = vlog2.pop %v980
        %v982 = vmul.f32 %v981, 0.6931472
        %v983 = vmul.f32 -0.5, %v970
        %v984 = vadd.f32 %v983, 1.0
        %v985 = vmul.f32 %v984, %v970
        %v986 = vand.u32 2147483647, %v970
        %vm987 = vcmp.lt.f32.partialorder %v986, 0.0004427343
        %v988 = vsel %vm987, %v985, %v982
        %v989 = vsel %vm963, %v957, %v979
        %v990 = vsel %vm964, %v960, %v988
        %993 = vrot.lane.b32.xlu0 %v957, 112
        %v994 = vpop.permute.xlu0 %993
        %995 = vrot.lane.b32.xlu0 %v960, 112
        %v996 = vpop.permute.xlu0 %995
        %v999 = vmul.f32 %v957, %v994
        %v1000 = vmul.f32 %v960, %v996
        %1003 = vrot.lane.b32.xlu0 %v999, 64
        %v1004 = vpop.permute.xlu0 %1003
        %1005 = vrot.lane.b32.xlu0 %v1000, 64
        %v1006 = vpop.permute.xlu0 %1005
        %vm1009 = vcmask 130048
        %v1010 = vsel %vm1009, %v1004, 0.0
        %1011 = vadd.xlane.f32.xlu0 %v1010
        %v1012 = vpop.xlane.xlu0 %1011
        %v1013 = vsel %vm1009, %v1006, 0.0
        %1014 = vadd.xlane.f32.xlu0 %v1013
        %v1015 = vpop.xlane.xlu0 %1014
        %v1016 = vmul.f32 %v873, %v989
        %v1017 = vmul.f32 %v876, %v990
        %v1018 = vmul.f32 %v1016, %v1012
        %v1019 = vmul.f32 %v1017, %v1015
        %v1020 = vxor.u32 %v1018, 2147483648
        %v1021 = vxor.u32 %v1019, 2147483648
        %v1022 = vmul.f32 %v1020, 1.442695
        %v1023 = vpow.pop %v1022
        %v1024 = vmul.f32 %v1021, 1.442695
        %v1025 = vpow.pop %v1024
        %v1026 = vadd.f32 %v1023, 1.0
        %v1027 = vadd.f32 %v1025, 1.0
        %v1028 = vrcp.pop %v1026
        %v1029 = vmul.f32 1.0, %v1028
        %v1030 = vrcp.pop %v1027
        %v1031 = vmul.f32 1.0, %v1030
        %v1032 = vmul.f32 %v1018, %v1029
        %v1033 = vmul.f32 %v1019, %v1031
        %1036 = vrot.lane.b32.xlu0 %v592, 64
        %v1037 = vpop.permute.xlu0 %1036
        %1038 = vrot.lane.b32.xlu0 %v593, 64
        %v1039 = vpop.permute.xlu0 %1038
        %v1042 = vmul.f32 %v1032, %v1037
        %v1043 = vmul.f32 %v1033, %v1039
        %v1044 = vpack.c.bf16 %v1043, %v1042
        %v1045 = vld [vmem:[%s10] sm:$0xf]
        %v1046 = vld [vmem:[%s10 + $0x4] sm:$0xf]
        %v1047 = vld [vmem:[%s10 + $0x8] sm:$0xf]
        %v1048 = vld [vmem:[%s10 + $0xc] sm:$0xf]
        %v1049 = vld [vmem:[%s10 + $0x10] sm:$0xf]
        %v1050 = vld [vmem:[%s10 + $0x14] sm:$0xf]
        %v1051 = vld [vmem:[%s10 + $0x18] sm:$0xf]
        %v1052 = vld [vmem:[%s10 + $0x1c] sm:$0xf]
        %v1053 = vld [vmem:[%s11] sm:$0x1]
        %v1055 = vlaneseq
        %v1056 = vshrl.u32 %v1055, 7
        %v1057 = vsub.s32 0, %v1056
        %v1058 = vrot.slane %v1053, %v1057
        %v1068 = vunpack.c.l.b16 %v1045
        %v1069 = vunpack.c.l.b16 %v1046
        %v1070 = vunpack.c.l.b16 %v1047
        %v1071 = vunpack.c.l.b16 %v1048
        %v1072 = vunpack.c.l.b16 %v1049
        %v1073 = vunpack.c.l.b16 %v1050
        %v1074 = vunpack.c.l.b16 %v1051
        %v1075 = vunpack.c.l.b16 %v1052
        %v1076 = vpack.c.b16 %v1069, %v1068
        %v1077 = vpack.c.b16 %v1071, %v1070
        %v1078 = vpack.c.b16 %v1073, %v1072
        %v1079 = vpack.c.b16 %v1075, %v1074
        %v1085 = vsel %vm834, %v1044, 0
        %1087 = vmatprep.subr.bf16.mxu0 0
        %1088 = vmatpush1.bf16.msra.mxu0 0
        %1089 = vmatprep.subr.bf16.mxu0 0
        %1090 = vmatpush1.bf16.msra.mxu0 0
        %1091 = vmatprep.subr.bf16.mxu0 0
        %1092 = vmatpush1.bf16.msra.mxu0 0
        %1093 = vmatprep.subr.bf16.mxu0 0
        %1094 = vmatpush1.bf16.msra.mxu0 0
        %1095 = vmatprep.subr.bf16.mxu0 0
        %1096 = vmatpush1.bf16.msra.mxu0 %v1079
        %1097 = vmatprep.subr.bf16.mxu0 0
        %1098 = vmatpush1.bf16.msra.mxu0 %v1078
        %1099 = vmatprep.subr.bf16.mxu0 0
        %1100 = vmatpush1.bf16.msra.mxu0 %v1077
        %1101 = vmatprep.subr.bf16.mxu0 0
        %1102 = vmatpush1.bf16.msra.mxu0 %v1076
        %1103 = vmatprep.subr.bf16.mxu0 0
        %1104 = vmatpush2.bf16.msra.mxu0 0
        %1105 = vmatprep.subr.bf16.mxu0 0
        %1106 = vmatpush2.bf16.msra.mxu0 0
        %1107 = vmatprep.subr.bf16.mxu0 0
        %1108 = vmatpush2.bf16.msra.mxu0 0
        %1109 = vmatprep.subr.bf16.mxu0 0
        %1110 = vmatpush2.bf16.msra.mxu0 0
        %1111 = vmatprep.subr.bf16.mxu0 0
        %1112 = vmatpush2.bf16.msra.mxu0 0
        %1113 = vmatprep.subr.bf16.mxu0 0
        %1114 = vmatpush2.bf16.msra.mxu0 0
        %1115 = vmatprep.subr.bf16.mxu0 0
        %1116 = vmatpush2.bf16.msra.mxu0 0
        %1117 = vmatprep.subr.bf16.mxu0 0
        %1118 = vmatpush2.bf16.msra.mxu0 0
        %1119 = vmatprep.mubr.bf16.mxu0 0
        %1120 = vmatmul.mubr.bf16.gmra.mxu0 %v1085
        %v1121 = vpop.f32.mrf.mxu0
        %v1122 = vadd.f32 %v1058, %v1121
        %v1123 = vpop.f32.mrf.mxu0
        %v1124 = vpop.f32.mrf.mxu0
        %v1125 = vadd.f32 %v1058, %v1124
        %v1126 = vpop.f32.mrf.mxu0
        %1127 = vdwg.mxu0
        %1128 = vst.msk [vmem:[%s474] sm:$0xff] %vm487, %v1122
        %1129 = vst.msk [vmem:[%s474 + $0x8] sm:$0xff] %vm487, %v1125
        %s1130 = sand.u32 %s294, 1
        %s1131 = scalar_lea.sflag [#allocation4], %s1130
        %s1132 = sand.u32 %s294, 1
        %s1133 = smul.addr %s1132, 16
        %s1134 = scalar_lea.vmem [#allocation11], %s1133
        // Predicated region
        $region89: #{fwd.1} parent=67 // pred_check
          %p1135 = pneg %p304
        $region90: #{fwd.1} parent=67 // pred_check_branch
          %1137 = sbr.rel (%p1135) target = $region92
        $region91: #{fwd.1} parent=67 // pred_region
          %s1138 = smul.u32 2, %s29
          %s1140 = ssub.s32 256, 256
          %1141 = vsyncadd %s1131, %s1140
          %s1142 = smul.addr %s1138, 128
          %s1143 = scalar_lea.hbm %s12, %s1142
          %s1144 = sshll.u32 %s1134, 4
          %s1145 = int_to_ptr.vmem [resolvable:$true] %s1144
          %1150 = dma.vmem_to_hbm [thread:$0]  %s1145, 256, %s1143, %s1131, 128, 128, 8
        $region92: #{fwd.1} parent=67 // pred_fallthru
          _
      $region68: #{fwd.1} parent=5 // pred_fallthru
        _
      %p1151 = scmp.le.s32.totalorder 2, %s24
      // Predicated region
      $region93: #{fwd.1} parent=5 // pred_check
        %p1152 = pneg %p1151
      $region94: #{fwd.1} parent=5 // pred_check_branch
        %1154 = sbr.rel (%p1152) target = $region96
      $region95: #{fwd.1} parent=5 // pred_region
        %s1155 = ssub.s32 %s24, 2
        // Predicated region
        $region97: #{fwd.1} parent=95 // pred_check
          %p1156 = pneg %p310
        $region98: #{fwd.1} parent=95 // pred_check_branch
          %1158 = sbr.rel (%p1156) target = $region100
        $region99: #{fwd.1} parent=95 // pred_region
          %s1159 = sand.u32 %s295, 1
          %s1160 = scalar_lea.sflag [#allocation4], %s1159
          %s1161 = sand.u32 %s295, 1
          %s1162 = smul.addr %s1161, 16
          %s1163 = scalar_lea.vmem [#allocation11], %s1162
          %1164 = dma.done %s1160, 256
        $region100: #{fwd.1} parent=95 // pred_fallthru
          _
      $region96: #{fwd.1} parent=5 // pred_fallthru
        _
    $region6: #{fwd.1} parent=1 // loop_footer
      %s28 = sadd.s32 1, %s24
    $region7: #{fwd.1} parent=1 // loop_footer_branch
      %23 = sbr.rel target = $region3
    $region8: #{fwd.1} parent=1 // loop_exit
      _
    %1165 = vsyncpa [#allocation3], 1
    %s1166 = scalar_lea.sflag [#allocation3], 1
    %1167 = vsyncpa %s1166, 1
    %1168 = vsyncpa [#allocation6], 1
    %1169 = vsyncpa [#allocation9], 1
    %1170 = vsyncpa [#allocation4], 1
    %s1171 = scalar_lea.sflag [#allocation4], 1
    %1172 = vsyncpa %s1171, 1

</llo_original>
